<compile_context>
chip_gen: v5e
topology: v5e:2x2
jax: 0.10.0
libtpu: 0.0.40
codegen_flags: <defaults>
</compile_context>

<pallas_src>
import functools

import jax
import jax.numpy as jnp
from jax import lax
from jax.experimental import pallas as pl
from jax.experimental.pallas import tpu as pltpu

_VMEM_LIMIT = 32 * 1024 * 1024  # re-derived for v7x (64 MiB physical VMEM)


def _compiler_params():
    return pltpu.CompilerParams(
        dimension_semantics=("parallel",),  # batch axis -> shard across TCs on v7x
        vmem_limit_bytes=_VMEM_LIMIT,
    )


# ----------------------------------------------------------------------------
# Fused FireModule kernels
# ----------------------------------------------------------------------------

def _make_fire_s1_kernel(H, W, Cin, Mid, Half, skip):
    """stride=1 fused FireModule (squeeze + both expand branches + BN + ReLU)."""
    HW = H * W

    def kernel(x_ref, w1_ref, b1_ref, w11_ref, b2a_ref, wdw_ref, b2b_ref,
               o_ref, hpad_ref):
        x = x_ref[0]                                            # (H, W, Cin) bf16
        # --- squeeze: 1x1 conv, bn1 scale folded into w1 (bf16 MXU, f32 acc) ---
        h = jnp.dot(x.reshape(HW, Cin), w1_ref[...],
                    preferred_element_type=jnp.float32) + b1_ref[...]

        # --- branch a: 1x1 expand (bn2 scale folded) [+skip] + relu -----------
        a = jnp.dot(h.astype(jnp.bfloat16), w11_ref[...],
                    preferred_element_type=jnp.float32) + b2a_ref[...]
        if skip:
            a = a + x.reshape(HW, Cin)[:, 0:Half].astype(jnp.float32)
        a = jnp.maximum(a, 0.0)
        o_ref[0, :, :, 0:Half] = a.reshape(H, W, Half)

        # --- branch b: depthwise 3x3 (bn2 scale folded) [+skip] + relu --------
        # The zero halo belongs to h (conv_3x3 pads its input h, not x), so it
        # is built in a VMEM scratch inside the kernel (no glue-side jnp.pad).
        hpad_ref[...] = jnp.zeros(hpad_ref.shape, hpad_ref.dtype)
        hpad_ref[1:H + 1, 1:W + 1, :] = h.reshape(H, W, Mid)
        acc = jnp.zeros((H, W, Mid), jnp.float32)
        for ky in range(3):
            for kx in range(3):
                acc = acc + hpad_ref[ky:ky + H, kx:kx + W, :] * wdw_ref[3 * ky + kx]
        b = acc + b2b_ref[...]
        if skip:
            b = b + x[:, :, Half:2 * Half].astype(jnp.float32)
        b = jnp.maximum(b, 0.0)
        o_ref[0, :, :, Half:2 * Half] = b

    return kernel


def _make_fire_s2_kernel(Hq, Wq, Cin, Mid, Half):
    """stride=2 fused FireModule, computed directly at the strided output
    positions via a 2x2 parity (space-to-depth) decomposition of the input."""
    M = Hq * Wq

    def kernel(xee_ref, xeo_ref, xoe_ref, xoo_ref,
               w1_ref, b1_ref, w11_ref, b2a_ref, wdw_ref, b2b_ref,
               o_ref, hpad_ref):
        # squeeze all four parity planes with one (4M, Cin) x (Cin, Mid) matmul
        xall = jnp.concatenate(
            [xee_ref[0].reshape(M, Cin), xeo_ref[0].reshape(M, Cin),
             xoe_ref[0].reshape(M, Cin), xoo_ref[0].reshape(M, Cin)], axis=0)
        h = jnp.dot(xall, w1_ref[...],
                    preferred_element_type=jnp.float32) + b1_ref[...]
        h_ee = h[0:M]                                           # even-row/even-col

        # --- branch a: the stride-2 1x1 expand only reads h at (2oy, 2ox) ----
        a = jnp.dot(h_ee.astype(jnp.bfloat16), w11_ref[...],
                    preferred_element_type=jnp.float32) + b2a_ref[...]
        a = jnp.maximum(a, 0.0)                 # skip never active at stride 2
        o_ref[0, :, :, 0:Half] = a.reshape(Hq, Wq, Half)

        # --- branch b: stride-2 depthwise 3x3 via the parity decomposition ---
        # hpad_ref[p] holds plane p (0=eo, 1=oe, 2=oo) zero-padded by one row
        # at the top and one column on the left (the pad=1 boundary).
        hpad_ref[...] = jnp.zeros(hpad_ref.shape, hpad_ref.dtype)
        hpad_ref[0, 1:Hq + 1, 1:Wq + 1, :] = h[M:2 * M].reshape(Hq, Wq, Mid)
        hpad_ref[1, 1:Hq + 1, 1:Wq + 1, :] = h[2 * M:3 * M].reshape(Hq, Wq, Mid)
        hpad_ref[2, 1:Hq + 1, 1:Wq + 1, :] = h[3 * M:4 * M].reshape(Hq, Wq, Mid)

        def w(ky, kx):
            return wdw_ref[3 * ky + kx]          # (1, Mid), broadcasts over (Hq, Wq, Mid)

        acc = h_ee.reshape(Hq, Wq, Mid) * w(1, 1)                   # (2oy  , 2ox  )
        acc = acc + hpad_ref[0, 1:Hq + 1, 0:Wq,     :] * w(1, 0)    # (2oy  , 2ox-1)
        acc = acc + hpad_ref[0, 1:Hq + 1, 1:Wq + 1, :] * w(1, 2)    # (2oy  , 2ox+1)
        acc = acc + hpad_ref[1, 0:Hq,     1:Wq + 1, :] * w(0, 1)    # (2oy-1, 2ox  )
        acc = acc + hpad_ref[1, 1:Hq + 1, 1:Wq + 1, :] * w(2, 1)    # (2oy+1, 2ox  )
        acc = acc + hpad_ref[2, 0:Hq,     0:Wq,     :] * w(0, 0)    # (2oy-1, 2ox-1)
        acc = acc + hpad_ref[2, 0:Hq,     1:Wq + 1, :] * w(0, 2)    # (2oy-1, 2ox+1)
        acc = acc + hpad_ref[2, 1:Hq + 1, 0:Wq,     :] * w(2, 0)    # (2oy+1, 2ox-1)
        acc = acc + hpad_ref[2, 1:Hq + 1, 1:Wq + 1, :] * w(2, 2)    # (2oy+1, 2ox+1)
        b = jnp.maximum(acc + b2b_ref[...], 0.0)
        o_ref[0, :, :, Half:2 * Half] = b

    return kernel


@functools.lru_cache(maxsize=None)
def _fire_s1_call(N, H, W, Cin, Mid, Half, skip):
    Cout = 2 * Half
    kernel = _make_fire_s1_kernel(H, W, Cin, Mid, Half, skip)
    return pl.pallas_call(
        kernel,
        out_shape=jax.ShapeDtypeStruct((N, H, W, Cout), jnp.float32),
        grid=(N,),
        in_specs=[
            pl.BlockSpec((1, H, W, Cin), lambda n: (n, 0, 0, 0)),
            pl.BlockSpec((Cin, Mid), lambda n: (0, 0)),
            pl.BlockSpec((1, Mid), lambda n: (0, 0)),
            pl.BlockSpec((Mid, Half), lambda n: (0, 0)),
            pl.BlockSpec((1, Half), lambda n: (0, 0)),
            pl.BlockSpec((9, 1, Mid), lambda n: (0, 0, 0)),
            pl.BlockSpec((1, Half), lambda n: (0, 0)),
        ],
        out_specs=pl.BlockSpec((1, H, W, Cout), lambda n: (n, 0, 0, 0)),
        scratch_shapes=[pltpu.VMEM((H + 2, W + 2, Mid), jnp.float32)],
        compiler_params=_compiler_params(),
    )


@functools.lru_cache(maxsize=None)
def _fire_s2_call(N, Hq, Wq, Cin, Mid, Half):
    Cout = 2 * Half
    kernel = _make_fire_s2_kernel(Hq, Wq, Cin, Mid, Half)
    x_spec = pl.BlockSpec((1, Hq, Wq, Cin), lambda n: (n, 0, 0, 0))
    return pl.pallas_call(
        kernel,
        out_shape=jax.ShapeDtypeStruct((N, Hq, Wq, Cout), jnp.float32),
        grid=(N,),
        in_specs=[
            x_spec, x_spec, x_spec, x_spec,
            pl.BlockSpec((Cin, Mid), lambda n: (0, 0)),
            pl.BlockSpec((1, Mid), lambda n: (0, 0)),
            pl.BlockSpec((Mid, Half), lambda n: (0, 0)),
            pl.BlockSpec((1, Half), lambda n: (0, 0)),
            pl.BlockSpec((9, 1, Mid), lambda n: (0, 0, 0)),
            pl.BlockSpec((1, Half), lambda n: (0, 0)),
        ],
        out_specs=pl.BlockSpec((1, Hq, Wq, Cout), lambda n: (n, 0, 0, 0)),
        scratch_shapes=[pltpu.VMEM((3, Hq + 1, Wq + 1, Mid), jnp.float32)],
        compiler_params=_compiler_params(),
    )


# ----------------------------------------------------------------------------
# Public forward (NCHW in / NCHW out, like the PyTorch module)
# ----------------------------------------------------------------------------

def fire_module_forward(x_nchw, params, stride=1):
    """FireModule forward pass (inference-mode BatchNorm, folded into params)."""
    x = jnp.transpose(x_nchw, (0, 2, 3, 1)).astype(jnp.bfloat16)   # NHWC, bf16
    N, H, W, Cin = x.shape
    Cin_w, Mid = params['w1'].shape
    Half = params['w11'].shape[1]
    assert Cin == Cin_w and Mid == Half
    skip = (stride == 1) and (Cin == 2 * Half)

    if stride == 1:
        call = _fire_s1_call(N, H, W, Cin, Mid, Half, skip)
        y = call(x, params['w1'], params['b1'], params['w11'], params['b2a'],
                 params['wdw'], params['b2b'])
    elif stride == 2:
        assert H % 2 == 0 and W % 2 == 0
        xee, xeo = x[:, 0::2, 0::2, :], x[:, 0::2, 1::2, :]
        xoe, xoo = x[:, 1::2, 0::2, :], x[:, 1::2, 1::2, :]
        call = _fire_s2_call(N, H // 2, W // 2, Cin, Mid, Half)
        y = call(xee, xeo, xoe, xoo, params['w1'], params['b1'], params['w11'],
                 params['b2a'], params['wdw'], params['b2b'])
    else:
        raise NotImplementedError("stride must be 1 or 2")
    return jnp.transpose(y, (0, 3, 1, 2))                          # back to NCHW


# ----------------------------------------------------------------------------
# Parameters (raw PyTorch-style params -> folded/bf16 kernel params)
# ----------------------------------------------------------------------------

def make_fire_params(key, inp_dim, out_dim, sr=2):
    assert out_dim % sr == 0 and out_dim % 2 == 0
    mid, half = out_dim // sr, out_dim // 2
    # TODO(synk): general grouped conv_3x3 (sr != 2) is not implemented; the
    #             hourglass only uses sr=2, where conv_3x3 is depthwise.
    assert mid == half
    ks = jax.random.split(key, 5)

    def conv(k, shape, fan_in):
        return jax.random.normal(k, shape, jnp.float32) * jnp.sqrt(2.0 / fan_in)

    def bn(k, c):
        kk = jax.random.split(k, 3)
        gamma = 0.5 + 0.05 * jax.random.normal(kk[0], (c,), jnp.float32)
        beta = 0.05 * jax.random.normal(kk[1], (c,), jnp.float32)
        mean = 0.05 * jax.random.normal(kk[2], (c,), jnp.float32)
        var = jnp.ones((c,), jnp.float32)
        return (gamma, beta, mean, var)

    return dict(
        w1=conv(ks[0], (inp_dim, mid), inp_dim),      # conv1.weight.T   (Cin, Mid)
        bn1=bn(ks[1], mid),
        w11=conv(ks[2], (mid, half), mid),            # conv_1x1.weight.T (Mid, Half)
        wdw=conv(ks[3], (3, 3, mid), 9),              # depthwise 3x3
        bn2=bn(ks[4], out_dim),
    )


def fold_fire_params(raw, eps=1e-5):
    """Fold the (inference-mode) BN scales into the conv weights; bf16 weights
    for the MXU matmuls, f32 biases and depthwise taps for the VPU epilogue."""
    g1, be1, m1, v1 = raw['bn1']
    s1 = g1 / jnp.sqrt(v1 + eps)
    t1 = be1 - m1 * s1
    g2, be2, m2, v2 = raw['bn2']
    s2 = g2 / jnp.sqrt(v2 + eps)
    t2 = be2 - m2 * s2
    mid = raw['w1'].shape[1]
    half = raw['w11'].shape[1]
    return dict(
        w1=(raw['w1'] * s1[None, :]).astype(jnp.bfloat16),
        b1=t1.reshape(1, mid).astype(jnp.float32),
        w11=(raw['w11'] * s2[None, :half]).astype(jnp.bfloat16),
        b2a=t2[:half].reshape(1, half).astype(jnp.float32),
        wdw=(raw['wdw'] * s2[None, None, half:]).reshape(9, 1, mid).astype(jnp.float32),
        b2b=t2[half:].reshape(1, half).astype(jnp.float32),
    )


# ----------------------------------------------------------------------------
# Pure-JAX (f32, unfolded) reference of the PyTorch forward, for verification
# ----------------------------------------------------------------------------

def fire_reference(x_nchw, raw, stride):
    x = jnp.transpose(x_nchw, (0, 2, 3, 1)).astype(jnp.float32)
    inp = x.shape[-1]
    mid = raw['w1'].shape[1]
    half = raw['w11'].shape[1]
    out_dim = 2 * half
    dn = ('NHWC', 'HWIO', 'NHWC')

    def bn(y, p, eps=1e-5):
        g, b, m, v = p
        s = g / jnp.sqrt(v + eps)
        return y * s + (b - m * s)

    h = lax.conv_general_dilated(x, raw['w1'][None, None], (1, 1), 'VALID',
                                 dimension_numbers=dn)
    h = bn(h, raw['bn1'])
    a = lax.conv_general_dilated(h, raw['w11'][None, None], (stride, stride),
                                 'VALID', dimension_numbers=dn)
    b = lax.conv_general_dilated(h, raw['wdw'][:, :, None, :], (stride, stride),
                                 ((1, 1), (1, 1)), dimension_numbers=dn,
                                 feature_group_count=mid)
    out = bn(jnp.concatenate([a, b], axis=-1), raw['bn2'])
    if stride == 1 and inp == out_dim:
        out = out + x
    return jnp.transpose(jnp.maximum(out, 0.0), (0, 3, 1, 2))


# ----------------------------------------------------------------------------

if __name__ == "__main__":
    key = jax.random.PRNGKey(0)
    k_x, k_p1, k_p2 = jax.random.split(key, 3)

    fire_fwd = jax.jit(fire_module_forward, static_argnames=("stride",))

    x = jax.random.normal(k_x, (2, 256, 16, 16), jnp.float32)  # NCHW, like PyTorch

    # Case 1: stride=1, inp_dim == out_dim == 256  -> identity skip active.
    raw1 = make_fire_params(k_p1, 256, 256)
    p1 = fold_fire_params(raw1)
    out1 = jax.block_until_ready(fire_fwd(x, p1, stride=1))
    ref1 = fire_reference(x, raw1, 1)
    assert out1.shape == (2, 256, 16, 16), out1.shape
    assert bool(jnp.all(jnp.isfinite(out1)))
    err1 = float(jnp.max(jnp.abs(out1 - ref1) / (1.0 + jnp.abs(ref1))))
    assert err1 < 7.5e-2, err1

    # Case 2: stride=2 downsampling FireModule (skip disabled).
    raw2 = make_fire_params(k_p2, 256, 256)
    p2 = fold_fire_params(raw2)
    out2 = jax.block_until_ready(fire_fwd(x, p2, stride=2))
    ref2 = fire_reference(x, raw2, 2)
    assert out2.shape == (2, 256, 8, 8), out2.shape
    assert bool(jnp.all(jnp.isfinite(out2)))
    err2 = float(jnp.max(jnp.abs(out2 - ref2) / (1.0 + jnp.abs(ref2))))
    assert err2 < 7.5e-2, err2

    print("KERNEL_OK")
</pallas_src>

<mosaic_0001>
module attributes {stable_mosaic.version = 11 : i64} {
  func.func @kernel(%arg0: i32, %arg1: memref<1x16x16x256xbf16, #tpu.memory_space<vmem>>, %arg2: memref<256x128xbf16, #tpu.memory_space<vmem>>, %arg3: memref<1x128xf32, #tpu.memory_space<vmem>>, %arg4: memref<128x128xbf16, #tpu.memory_space<vmem>>, %arg5: memref<1x128xf32, #tpu.memory_space<vmem>>, %arg6: memref<9x1x128xf32, #tpu.memory_space<vmem>>, %arg7: memref<1x128xf32, #tpu.memory_space<vmem>>, %arg8: memref<1x16x16x256xf32, #tpu.memory_space<vmem>>, %arg9: memref<18x18x128xf32, #tpu.memory_space<vmem>>) attributes {dimension_semantics = [#tpu.dimension_semantics<parallel>], iteration_bounds = array<i64: 2>, scalar_prefetch = 0 : i64, scratch_operands = 1 : i64, tpu.core_type = #tpu.core_type<tc>, window_params = [{transform_indices = @transform_0, window_bounds = array<i64: 1, 16, 16, 256>}, {pipeline_mode = #tpu.pipeline_mode<synchronous>, transform_indices = @transform_1, window_bounds = array<i64: 256, 128>}, {pipeline_mode = #tpu.pipeline_mode<synchronous>, transform_indices = @transform_2, window_bounds = array<i64: 1, 128>}, {pipeline_mode = #tpu.pipeline_mode<synchronous>, transform_indices = @transform_3, window_bounds = array<i64: 128, 128>}, {pipeline_mode = #tpu.pipeline_mode<synchronous>, transform_indices = @transform_4, window_bounds = array<i64: 1, 128>}, {pipeline_mode = #tpu.pipeline_mode<synchronous>, transform_indices = @transform_5, window_bounds = array<i64: 9, 1, 128>}, {pipeline_mode = #tpu.pipeline_mode<synchronous>, transform_indices = @transform_6, window_bounds = array<i64: 1, 128>}, {transform_indices = @transform_7, window_bounds = array<i64: 1, 16, 16, 256>}]} {
    %c0 = arith.constant 0 : index
    %c0_0 = arith.constant 0 : index
    %c0_1 = arith.constant 0 : index
    %c0_2 = arith.constant 0 : index
    %0 = vector.load %arg1[%c0, %c0_0, %c0_1, %c0_2] : memref<1x16x16x256xbf16, #tpu.memory_space<vmem>>, vector<1x16x16x256xbf16>
    %1 = vector.shape_cast %0 : vector<1x16x16x256xbf16> to vector<16x16x256xbf16>
    %2 = vector.shape_cast %1 : vector<16x16x256xbf16> to vector<256x256xbf16>
    %c0_3 = arith.constant 0 : index
    %c0_4 = arith.constant 0 : index
    %3 = vector.load %arg2[%c0_3, %c0_4] : memref<256x128xbf16, #tpu.memory_space<vmem>>, vector<256x128xbf16>
    %cst = arith.constant dense<0.000000e+00> : vector<256x128xf32>
    %4 = tpu.matmul %2, %3, %cst {dimension_numbers = #tpu.dot_dimension_numbers<[1], [0], [0], [1], [0, 0, 1, 1], [], []>} : vector<256x256xbf16>, vector<256x128xbf16>, vector<256x128xf32> -> vector<256x128xf32>
    %c0_5 = arith.constant 0 : index
    %c0_6 = arith.constant 0 : index
    %5 = vector.load %arg3[%c0_5, %c0_6] : memref<1x128xf32, #tpu.memory_space<vmem>>, vector<1x128xf32>
    %6 = vector.broadcast %5 : vector<1x128xf32> to vector<256x128xf32>
    %7 = arith.addf %4, %6 : vector<256x128xf32>
    %8 = arith.truncf %7 : vector<256x128xf32> to vector<256x128xbf16>
    %c0_7 = arith.constant 0 : index
    %c0_8 = arith.constant 0 : index
    %9 = vector.load %arg4[%c0_7, %c0_8] : memref<128x128xbf16, #tpu.memory_space<vmem>>, vector<128x128xbf16>
    %cst_9 = arith.constant dense<0.000000e+00> : vector<256x128xf32>
    %10 = tpu.matmul %8, %9, %cst_9 {dimension_numbers = #tpu.dot_dimension_numbers<[1], [0], [0], [1], [0, 0, 1, 1], [], []>} : vector<256x128xbf16>, vector<128x128xbf16>, vector<256x128xf32> -> vector<256x128xf32>
    %c0_10 = arith.constant 0 : index
    %c0_11 = arith.constant 0 : index
    %11 = vector.load %arg5[%c0_10, %c0_11] : memref<1x128xf32, #tpu.memory_space<vmem>>, vector<1x128xf32>
    %12 = vector.broadcast %11 : vector<1x128xf32> to vector<256x128xf32>
    %13 = arith.addf %10, %12 : vector<256x128xf32>
    %14 = vector.shape_cast %1 : vector<16x16x256xbf16> to vector<256x256xbf16>
    %15 = vector.extract_strided_slice %14 {offsets = [0, 0], sizes = [256, 128], strides = [1, 1]} : vector<256x256xbf16> to vector<256x128xbf16>
    %16 = arith.extf %15 : vector<256x128xbf16> to vector<256x128xf32>
    %17 = arith.addf %13, %16 : vector<256x128xf32>
    %cst_12 = arith.constant 0.000000e+00 : f32
    %18 = vector.broadcast %cst_12 : f32 to vector<256x128xf32>
    %19 = arith.maximumf %17, %18 : vector<256x128xf32>
    %20 = vector.shape_cast %19 : vector<256x128xf32> to vector<16x16x128xf32>
    %c0_13 = arith.constant 0 : index
    %c0_14 = arith.constant 0 : index
    %c0_15 = arith.constant 0 : index
    %c0_16 = arith.constant 0 : index
    %21 = vector.load %arg8[%c0_13, %c0_14, %c0_15, %c0_16] : memref<1x16x16x256xf32, #tpu.memory_space<vmem>>, vector<1x16x16x128xf32>
    %22 = vector.shape_cast %21 : vector<1x16x16x128xf32> to vector<16x16x128xf32>
    %23 = vector.shape_cast %20 : vector<16x16x128xf32> to vector<1x16x16x128xf32>
    tpu.vector_store %arg8[%c0_13, %c0_14, %c0_15, %c0_16], %23 {strides = array<i32>} : memref<1x16x16x256xf32, #tpu.memory_space<vmem>>, vector<1x16x16x128xf32>,
    %cst_17 = arith.constant 0.000000e+00 : f32
    %24 = vector.broadcast %cst_17 : f32 to vector<18x18x128xf32>
    %c0_18 = arith.constant 0 : index
    %c0_19 = arith.constant 0 : index
    %c0_20 = arith.constant 0 : index
    %25 = vector.load %arg9[%c0_18, %c0_19, %c0_20] : memref<18x18x128xf32, #tpu.memory_space<vmem>>, vector<18x18x128xf32>
    tpu.vector_store %arg9[%c0_18, %c0_19, %c0_20], %24 {strides = array<i32>} : memref<18x18x128xf32, #tpu.memory_space<vmem>>, vector<18x18x128xf32>,
    %26 = vector.shape_cast %7 : vector<256x128xf32> to vector<16x16x128xf32>
    %c1 = arith.constant 1 : index
    %c1_21 = arith.constant 1 : index
    %c0_22 = arith.constant 0 : index
    %27 = vector.load %arg9[%c1, %c1_21, %c0_22] : memref<18x18x128xf32, #tpu.memory_space<vmem>>, vector<16x16x128xf32>
    tpu.vector_store %arg9[%c1, %c1_21, %c0_22], %26 {strides = array<i32>} : memref<18x18x128xf32, #tpu.memory_space<vmem>>, vector<16x16x128xf32>,
    %cst_23 = arith.constant 0.000000e+00 : f32
    %28 = vector.broadcast %cst_23 : f32 to vector<16x16x128xf32>
    %c0_24 = arith.constant 0 : index
    %c0_25 = arith.constant 0 : index
    %c0_26 = arith.constant 0 : index
    %29 = vector.load %arg9[%c0_24, %c0_25, %c0_26] : memref<18x18x128xf32, #tpu.memory_space<vmem>>, vector<16x16x128xf32>
    %c0_27 = arith.constant 0 : index
    %c0_28 = arith.constant 0 : index
    %c0_29 = arith.constant 0 : index
    %30 = vector.load %arg6[%c0_27, %c0_28, %c0_29] : memref<9x1x128xf32, #tpu.memory_space<vmem>>, vector<1x1x128xf32>
    %31 = vector.shape_cast %30 : vector<1x1x128xf32> to vector<1x128xf32>
    %32 = vector.shape_cast %31 : vector<1x128xf32> to vector<1x1x128xf32>
    %33 = vector.broadcast %32 : vector<1x1x128xf32> to vector<16x16x128xf32>
    %34 = arith.mulf %29, %33 : vector<16x16x128xf32>
    %35 = arith.addf %28, %34 : vector<16x16x128xf32>
    %c0_30 = arith.constant 0 : index
    %c1_31 = arith.constant 1 : index
    %c0_32 = arith.constant 0 : index
    %36 = vector.load %arg9[%c0_30, %c1_31, %c0_32] : memref<18x18x128xf32, #tpu.memory_space<vmem>>, vector<16x16x128xf32>
    %c1_33 = arith.constant 1 : index
    %c0_34 = arith.constant 0 : index
    %c0_35 = arith.constant 0 : index
    %37 = vector.load %arg6[%c1_33, %c0_34, %c0_35] : memref<9x1x128xf32, #tpu.memory_space<vmem>>, vector<1x1x128xf32>
    %38 = vector.shape_cast %37 : vector<1x1x128xf32> to vector<1x128xf32>
    %39 = vector.shape_cast %38 : vector<1x128xf32> to vector<1x1x128xf32>
    %40 = vector.broadcast %39 : vector<1x1x128xf32> to vector<16x16x128xf32>
    %41 = arith.mulf %36, %40 : vector<16x16x128xf32>
    %42 = arith.addf %35, %41 : vector<16x16x128xf32>
    %c0_36 = arith.constant 0 : index
    %c2 = arith.constant 2 : index
    %c0_37 = arith.constant 0 : index
    %43 = vector.load %arg9[%c0_36, %c2, %c0_37] : memref<18x18x128xf32, #tpu.memory_space<vmem>>, vector<16x16x128xf32>
    %c2_38 = arith.constant 2 : index
    %c0_39 = arith.constant 0 : index
    %c0_40 = arith.constant 0 : index
    %44 = vector.load %arg6[%c2_38, %c0_39, %c0_40] : memref<9x1x128xf32, #tpu.memory_space<vmem>>, vector<1x1x128xf32>
    %45 = vector.shape_cast %44 : vector<1x1x128xf32> to vector<1x128xf32>
    %46 = vector.shape_cast %45 : vector<1x128xf32> to vector<1x1x128xf32>
    %47 = vector.broadcast %46 : vector<1x1x128xf32> to vector<16x16x128xf32>
    %48 = arith.mulf %43, %47 : vector<16x16x128xf32>
    %49 = arith.addf %42, %48 : vector<16x16x128xf32>
    %c1_41 = arith.constant 1 : index
    %c0_42 = arith.constant 0 : index
    %c0_43 = arith.constant 0 : index
    %50 = vector.load %arg9[%c1_41, %c0_42, %c0_43] : memref<18x18x128xf32, #tpu.memory_space<vmem>>, vector<16x16x128xf32>
    %c3 = arith.constant 3 : index
    %c0_44 = arith.constant 0 : index
    %c0_45 = arith.constant 0 : index
    %51 = vector.load %arg6[%c3, %c0_44, %c0_45] : memref<9x1x128xf32, #tpu.memory_space<vmem>>, vector<1x1x128xf32>
    %52 = vector.shape_cast %51 : vector<1x1x128xf32> to vector<1x128xf32>
    %53 = vector.shape_cast %52 : vector<1x128xf32> to vector<1x1x128xf32>
    %54 = vector.broadcast %53 : vector<1x1x128xf32> to vector<16x16x128xf32>
    %55 = arith.mulf %50, %54 : vector<16x16x128xf32>
    %56 = arith.addf %49, %55 : vector<16x16x128xf32>
    %c1_46 = arith.constant 1 : index
    %c1_47 = arith.constant 1 : index
    %c0_48 = arith.constant 0 : index
    %57 = vector.load %arg9[%c1_46, %c1_47, %c0_48] : memref<18x18x128xf32, #tpu.memory_space<vmem>>, vector<16x16x128xf32>
    %c4 = arith.constant 4 : index
    %c0_49 = arith.constant 0 : index
    %c0_50 = arith.constant 0 : index
    %58 = vector.load %arg6[%c4, %c0_49, %c0_50] : memref<9x1x128xf32, #tpu.memory_space<vmem>>, vector<1x1x128xf32>
    %59 = vector.shape_cast %58 : vector<1x1x128xf32> to vector<1x128xf32>
    %60 = vector.shape_cast %59 : vector<1x128xf32> to vector<1x1x128xf32>
    %61 = vector.broadcast %60 : vector<1x1x128xf32> to vector<16x16x128xf32>
    %62 = arith.mulf %57, %61 : vector<16x16x128xf32>
    %63 = arith.addf %56, %62 : vector<16x16x128xf32>
    %c1_51 = arith.constant 1 : index
    %c2_52 = arith.constant 2 : index
    %c0_53 = arith.constant 0 : index
    %64 = vector.load %arg9[%c1_51, %c2_52, %c0_53] : memref<18x18x128xf32, #tpu.memory_space<vmem>>, vector<16x16x128xf32>
    %c5 = arith.constant 5 : index
    %c0_54 = arith.constant 0 : index
    %c0_55 = arith.constant 0 : index
    %65 = vector.load %arg6[%c5, %c0_54, %c0_55] : memref<9x1x128xf32, #tpu.memory_space<vmem>>, vector<1x1x128xf32>
    %66 = vector.shape_cast %65 : vector<1x1x128xf32> to vector<1x128xf32>
    %67 = vector.shape_cast %66 : vector<1x128xf32> to vector<1x1x128xf32>
    %68 = vector.broadcast %67 : vector<1x1x128xf32> to vector<16x16x128xf32>
    %69 = arith.mulf %64, %68 : vector<16x16x128xf32>
    %70 = arith.addf %63, %69 : vector<16x16x128xf32>
    %c2_56 = arith.constant 2 : index
    %c0_57 = arith.constant 0 : index
    %c0_58 = arith.constant 0 : index
    %71 = vector.load %arg9[%c2_56, %c0_57, %c0_58] : memref<18x18x128xf32, #tpu.memory_space<vmem>>, vector<16x16x128xf32>
    %c6 = arith.constant 6 : index
    %c0_59 = arith.constant 0 : index
    %c0_60 = arith.constant 0 : index
    %72 = vector.load %arg6[%c6, %c0_59, %c0_60] : memref<9x1x128xf32, #tpu.memory_space<vmem>>, vector<1x1x128xf32>
    %73 = vector.shape_cast %72 : vector<1x1x128xf32> to vector<1x128xf32>
    %74 = vector.shape_cast %73 : vector<1x128xf32> to vector<1x1x128xf32>
    %75 = vector.broadcast %74 : vector<1x1x128xf32> to vector<16x16x128xf32>
    %76 = arith.mulf %71, %75 : vector<16x16x128xf32>
    %77 = arith.addf %70, %76 : vector<16x16x128xf32>
    %c2_61 = arith.constant 2 : index
    %c1_62 = arith.constant 1 : index
    %c0_63 = arith.constant 0 : index
    %78 = vector.load %arg9[%c2_61, %c1_62, %c0_63] : memref<18x18x128xf32, #tpu.memory_space<vmem>>, vector<16x16x128xf32>
    %c7 = arith.constant 7 : index
    %c0_64 = arith.constant 0 : index
    %c0_65 = arith.constant 0 : index
    %79 = vector.load %arg6[%c7, %c0_64, %c0_65] : memref<9x1x128xf32, #tpu.memory_space<vmem>>, vector<1x1x128xf32>
    %80 = vector.shape_cast %79 : vector<1x1x128xf32> to vector<1x128xf32>
    %81 = vector.shape_cast %80 : vector<1x128xf32> to vector<1x1x128xf32>
    %82 = vector.broadcast %81 : vector<1x1x128xf32> to vector<16x16x128xf32>
    %83 = arith.mulf %78, %82 : vector<16x16x128xf32>
    %84 = arith.addf %77, %83 : vector<16x16x128xf32>
    %c2_66 = arith.constant 2 : index
    %c2_67 = arith.constant 2 : index
    %c0_68 = arith.constant 0 : index
    %85 = vector.load %arg9[%c2_66, %c2_67, %c0_68] : memref<18x18x128xf32, #tpu.memory_space<vmem>>, vector<16x16x128xf32>
    %c8 = arith.constant 8 : index
    %c0_69 = arith.constant 0 : index
    %c0_70 = arith.constant 0 : index
    %86 = vector.load %arg6[%c8, %c0_69, %c0_70] : memref<9x1x128xf32, #tpu.memory_space<vmem>>, vector<1x1x128xf32>
    %87 = vector.shape_cast %86 : vector<1x1x128xf32> to vector<1x128xf32>
    %88 = vector.shape_cast %87 : vector<1x128xf32> to vector<1x1x128xf32>
    %89 = vector.broadcast %88 : vector<1x1x128xf32> to vector<16x16x128xf32>
    %90 = arith.mulf %85, %89 : vector<16x16x128xf32>
    %91 = arith.addf %84, %90 : vector<16x16x128xf32>
    %c0_71 = arith.constant 0 : index
    %c0_72 = arith.constant 0 : index
    %92 = vector.load %arg7[%c0_71, %c0_72] : memref<1x128xf32, #tpu.memory_space<vmem>>, vector<1x128xf32>
    %93 = vector.shape_cast %92 : vector<1x128xf32> to vector<1x1x128xf32>
    %94 = vector.broadcast %93 : vector<1x1x128xf32> to vector<16x16x128xf32>
    %95 = arith.addf %91, %94 : vector<16x16x128xf32>
    %96 = vector.extract_strided_slice %1 {offsets = [0, 0, 128], sizes = [16, 16, 128], strides = [1, 1, 1]} : vector<16x16x256xbf16> to vector<16x16x128xbf16>
    %97 = arith.extf %96 : vector<16x16x128xbf16> to vector<16x16x128xf32>
    %98 = arith.addf %95, %97 : vector<16x16x128xf32>
    %cst_73 = arith.constant 0.000000e+00 : f32
    %99 = vector.broadcast %cst_73 : f32 to vector<16x16x128xf32>
    %100 = arith.maximumf %98, %99 : vector<16x16x128xf32>
    %c0_74 = arith.constant 0 : index
    %c0_75 = arith.constant 0 : index
    %c0_76 = arith.constant 0 : index
    %c128 = arith.constant 128 : index
    %101 = vector.load %arg8[%c0_74, %c0_75, %c0_76, %c128] : memref<1x16x16x256xf32, #tpu.memory_space<vmem>>, vector<1x16x16x128xf32>
    %102 = vector.shape_cast %101 : vector<1x16x16x128xf32> to vector<16x16x128xf32>
    %103 = vector.shape_cast %100 : vector<16x16x128xf32> to vector<1x16x16x128xf32>
    tpu.vector_store %arg8[%c0_74, %c0_75, %c0_76, %c128], %103 {strides = array<i32>} : memref<1x16x16x256xf32, #tpu.memory_space<vmem>>, vector<1x16x16x128xf32>,
    return
  }
  func.func @transform_0(%arg0: i32) -> (i32, i32, i32, i32) {
    %c0_i32 = arith.constant 0 : i32
    %c0_i32_0 = arith.constant 0 : i32
    %c0_i32_1 = arith.constant 0 : i32
    %c0_i32_2 = arith.constant 0 : i32
    return %arg0, %c0_i32, %c0_i32_0, %c0_i32_1 : i32, i32, i32, i32
  }
  func.func @transform_1(%arg0: i32) -> (i32, i32) {
    %c0_i32 = arith.constant 0 : i32
    %c0_i32_0 = arith.constant 0 : i32
    %c0_i32_1 = arith.constant 0 : i32
    return %c0_i32, %c0_i32_0 : i32, i32
  }
  func.func @transform_2(%arg0: i32) -> (i32, i32) {
    %c0_i32 = arith.constant 0 : i32
    %c0_i32_0 = arith.constant 0 : i32
    %c0_i32_1 = arith.constant 0 : i32
    return %c0_i32, %c0_i32_0 : i32, i32
  }
  func.func @transform_3(%arg0: i32) -> (i32, i32) {
    %c0_i32 = arith.constant 0 : i32
    %c0_i32_0 = arith.constant 0 : i32
    %c0_i32_1 = arith.constant 0 : i32
    return %c0_i32, %c0_i32_0 : i32, i32
  }
  func.func @transform_4(%arg0: i32) -> (i32, i32) {
    %c0_i32 = arith.constant 0 : i32
    %c0_i32_0 = arith.constant 0 : i32
    %c0_i32_1 = arith.constant 0 : i32
    return %c0_i32, %c0_i32_0 : i32, i32
  }
  func.func @transform_5(%arg0: i32) -> (i32, i32, i32) {
    %c0_i32 = arith.constant 0 : i32
    %c0_i32_0 = arith.constant 0 : i32
    %c0_i32_1 = arith.constant 0 : i32
    %c0_i32_2 = arith.constant 0 : i32
    return %c0_i32, %c0_i32_0, %c0_i32_1 : i32, i32, i32
  }
  func.func @transform_6(%arg0: i32) -> (i32, i32) {
    %c0_i32 = arith.constant 0 : i32
    %c0_i32_0 = arith.constant 0 : i32
    %c0_i32_1 = arith.constant 0 : i32
    return %c0_i32, %c0_i32_0 : i32, i32
  }
  func.func @transform_7(%arg0: i32) -> (i32, i32, i32, i32) {
    %c0_i32 = arith.constant 0 : i32
    %c0_i32_0 = arith.constant 0 : i32
    %c0_i32_1 = arith.constant 0 : i32
    %c0_i32_2 = arith.constant 0 : i32
    return %arg0, %c0_i32, %c0_i32_0, %c0_i32_1 : i32, i32, i32, i32
  }
}

</mosaic_0001>

<llo_original>
// kernel: fire_module_forward.1
$region0: #{fire_module_forward.1}
  #allocation0 [shape = 'u32[]', space=smem, size = 0x4, offset = 0x4, fixed_abs, tag = 'smem constant byte address 0x4 - core index']
  #allocation1 [shape = 'u32[72,128]{1,0:T(1,128)}', space=vmem, size = 0x9000, scoped, tag = 'internal scratch']
  #allocation2 [shape = 'f32[18,18,128]{2,1,0:T(8,128)}', space=vmem, size = 0x36000, scoped, tag = 'scratch operand']
  %s0 = inlined_call_operand.vmem [shape: bf16[2,16,16,256], index: 0, kind: input, shape index: {}]
  %s1 = inlined_call_operand.vmem [shape: bf16[256,128], index: 1, kind: input, shape index: {}]
  %s2 = inlined_call_operand.vmem [shape: f32[1,128], index: 2, kind: input, shape index: {}]
  %s3 = inlined_call_operand.vmem [shape: bf16[128,128], index: 3, kind: input, shape index: {}]
  %s4 = inlined_call_operand.vmem [shape: f32[1,128], index: 4, kind: input, shape index: {}]
  %s5 = inlined_call_operand.vmem [shape: f32[9,1,128], index: 5, kind: input, shape index: {}]
  %s6 = inlined_call_operand.vmem [shape: f32[1,128], index: 6, kind: input, shape index: {}]
  %s7 = inlined_call_operand.hbm [shape: f32[2,16,16,256], index: 7, kind: output, shape index: {}]
  %s8 = sld [smem:[#allocation0]]
  $region61: #{fire_module_forward.1} parent=0
    _
  %s10 = ssub.s32 1, %s8
  %s11 = scalar_select 0, %s10, %s8
  $region1: #{fire_module_forward.1} parent=0
    #allocation3 [shape = 'u8[524288]{0}', space=vmem, size = 0x80000, scoped, tag = 'output window, operand 0']
    #allocation4 [shape = 's32[2]{0}', space=sflag, size = 0x8, scoped, tag = 'scoped memory for fire_module_forward.1']
    %12 = vsyncpa [#allocation4], 0
    %s13 = scalar_lea.sflag [#allocation4], 1
    %14 = vsyncpa %s13, 0
    loop: start=0, step=1, limit=4
    $region2: #{fire_module_forward.1} parent=1 // loop_pre_header
      _
    $region3: #{fire_module_forward.1} parent=1 // loop_header
      %s16 = sphi 0, %s20
      %p17 = scmp.ge.s32.totalorder %s16, 4
      %s26 = sphi 0, %s28
      %s29 = sphi 0, %s26
      %s30 = sphi 0, %s29
      %s46 = sphi 0, %s30
      %s50 = sphi 0, %s50
      %s52 = sphi 0, %s50
      %s53 = sphi 0, %s52
      %s67 = sphi 0, %s53
      %s71 = sphi 0, %s71
      %s73 = sphi 0, %s71
      %s74 = sphi 0, %s73
      %s88 = sphi 0, %s74
      %s92 = sphi 0, %s92
      %s94 = sphi 0, %s92
      %s95 = sphi 0, %s94
      %s109 = sphi 0, %s95
      %s113 = sphi 0, %s113
      %s115 = sphi 0, %s113
      %s116 = sphi 0, %s115
      %s130 = sphi 0, %s116
      %s134 = sphi 0, %s134
      %s136 = sphi 0, %s134
      %s137 = sphi 0, %s136
      %s151 = sphi 0, %s137
      %s155 = sphi 0, %s155
      %s157 = sphi 0, %s155
      %s158 = sphi 0, %s157
      %s172 = sphi 0, %s158
      %s178 = sphi 0, %s180
      %s181 = sphi 0, %s178
      %s182 = sphi 0, %s181
      %s198 = sphi 0, %s182
    $region4: #{fire_module_forward.1} parent=1 // loop_header_branch
      %19 = sbr.rel (%p17) target = $region8
    $region5: #{fire_module_forward.1} parent=1 // loop_body
      %s21 = ssub.s32 %s16, 1
      %s22 = ssub.s32 %s16, 2
      %s23 = sadd.s32 %s16, 1
      %s24 = ssub.s32 %s16, %s23
      %p25 = scmp.eq.s32.totalorder %s24, 0
      %s27 = sadd.s32 %s26, 1
      %s28 = scalar_select %p25, %s26, %s27
      %p31 = pneg %p25
      %p32 = scmp.eq.s32.totalorder %s16, 1
      %p33 = por %p31, %p32
      %p34 = scmp.ne.s32.totalorder %s26, %s29
      %p35 = scmp.eq.s32.totalorder %s16, 0
      %p36 = por %p34, %p35
      %p37 = scmp.ne.s32.totalorder %s26, %s29
      %p38 = scmp.eq.s32.totalorder %s21, 1
      %p39 = por %p37, %p38
      %p40 = scmp.ne.s32.totalorder %s29, %s30
      %p41 = scmp.eq.s32.totalorder %s21, 0
      %p42 = por %p40, %p41
      %p43 = scmp.ne.s32.totalorder %s29, %s30
      %p44 = scmp.eq.s32.totalorder %s22, 1
      %p45 = por %p43, %p44
      %p47 = scmp.ne.s32.totalorder %s30, %s46
      %p48 = scmp.eq.s32.totalorder %s22, 0
      %p49 = por %p47, %p48
      %s51 = sadd.s32 %s50, 1
      %p54 = scmp.eq.s32.totalorder %s16, 1
      %p55 = scmp.ne.s32.totalorder %s50, %s52
      %p56 = scmp.eq.s32.totalorder %s16, 0
      %p57 = por %p55, %p56
      %p58 = scmp.ne.s32.totalorder %s50, %s52
      %p59 = scmp.eq.s32.totalorder %s21, 1
      %p60 = por %p58, %p59
      %p61 = scmp.ne.s32.totalorder %s52, %s53
      %p62 = scmp.eq.s32.totalorder %s21, 0
      %p63 = por %p61, %p62
      %p64 = scmp.ne.s32.totalorder %s52, %s53
      %p65 = scmp.eq.s32.totalorder %s22, 1
      %p66 = por %p64, %p65
      %p68 = scmp.ne.s32.totalorder %s53, %s67
      %p69 = scmp.eq.s32.totalorder %s22, 0
      %p70 = por %p68, %p69
      %s72 = sadd.s32 %s71, 1
      %p75 = scmp.eq.s32.totalorder %s16, 1
      %p76 = scmp.ne.s32.totalorder %s71, %s73
      %p77 = scmp.eq.s32.totalorder %s16, 0
      %p78 = por %p76, %p77
      %p79 = scmp.ne.s32.totalorder %s71, %s73
      %p80 = scmp.eq.s32.totalorder %s21, 1
      %p81 = por %p79, %p80
      %p82 = scmp.ne.s32.totalorder %s73, %s74
      %p83 = scmp.eq.s32.totalorder %s21, 0
      %p84 = por %p82, %p83
      %p85 = scmp.ne.s32.totalorder %s73, %s74
      %p86 = scmp.eq.s32.totalorder %s22, 1
      %p87 = por %p85, %p86
      %p89 = scmp.ne.s32.totalorder %s74, %s88
      %p90 = scmp.eq.s32.totalorder %s22, 0
      %p91 = por %p89, %p90
      %s93 = sadd.s32 %s92, 1
      %p96 = scmp.eq.s32.totalorder %s16, 1
      %p97 = scmp.ne.s32.totalorder %s92, %s94
      %p98 = scmp.eq.s32.totalorder %s16, 0
      %p99 = por %p97, %p98
      %p100 = scmp.ne.s32.totalorder %s92, %s94
      %p101 = scmp.eq.s32.totalorder %s21, 1
      %p102 = por %p100, %p101
      %p103 = scmp.ne.s32.totalorder %s94, %s95
      %p104 = scmp.eq.s32.totalorder %s21, 0
      %p105 = por %p103, %p104
      %p106 = scmp.ne.s32.totalorder %s94, %s95
      %p107 = scmp.eq.s32.totalorder %s22, 1
      %p108 = por %p106, %p107
      %p110 = scmp.ne.s32.totalorder %s95, %s109
      %p111 = scmp.eq.s32.totalorder %s22, 0
      %p112 = por %p110, %p111
      %s114 = sadd.s32 %s113, 1
      %p117 = scmp.eq.s32.totalorder %s16, 1
      %p118 = scmp.ne.s32.totalorder %s113, %s115
      %p119 = scmp.eq.s32.totalorder %s16, 0
      %p120 = por %p118, %p119
      %p121 = scmp.ne.s32.totalorder %s113, %s115
      %p122 = scmp.eq.s32.totalorder %s21, 1
      %p123 = por %p121, %p122
      %p124 = scmp.ne.s32.totalorder %s115, %s116
      %p125 = scmp.eq.s32.totalorder %s21, 0
      %p126 = por %p124, %p125
      %p127 = scmp.ne.s32.totalorder %s115, %s116
      %p128 = scmp.eq.s32.totalorder %s22, 1
      %p129 = por %p127, %p128
      %p131 = scmp.ne.s32.totalorder %s116, %s130
      %p132 = scmp.eq.s32.totalorder %s22, 0
      %p133 = por %p131, %p132
      %s135 = sadd.s32 %s134, 1
      %p138 = scmp.eq.s32.totalorder %s16, 1
      %p139 = scmp.ne.s32.totalorder %s134, %s136
      %p140 = scmp.eq.s32.totalorder %s16, 0
      %p141 = por %p139, %p140
      %p142 = scmp.ne.s32.totalorder %s134, %s136
      %p143 = scmp.eq.s32.totalorder %s21, 1
      %p144 = por %p142, %p143
      %p145 = scmp.ne.s32.totalorder %s136, %s137
      %p146 = scmp.eq.s32.totalorder %s21, 0
      %p147 = por %p145, %p146
      %p148 = scmp.ne.s32.totalorder %s136, %s137
      %p149 = scmp.eq.s32.totalorder %s22, 1
      %p150 = por %p148, %p149
      %p152 = scmp.ne.s32.totalorder %s137, %s151
      %p153 = scmp.eq.s32.totalorder %s22, 0
      %p154 = por %p152, %p153
      %s156 = sadd.s32 %s155, 1
      %p159 = scmp.eq.s32.totalorder %s16, 1
      %p160 = scmp.ne.s32.totalorder %s155, %s157
      %p161 = scmp.eq.s32.totalorder %s16, 0
      %p162 = por %p160, %p161
      %p163 = scmp.ne.s32.totalorder %s155, %s157
      %p164 = scmp.eq.s32.totalorder %s21, 1
      %p165 = por %p163, %p164
      %p166 = scmp.ne.s32.totalorder %s157, %s158
      %p167 = scmp.eq.s32.totalorder %s21, 0
      %p168 = por %p166, %p167
      %p169 = scmp.ne.s32.totalorder %s157, %s158
      %p170 = scmp.eq.s32.totalorder %s22, 1
      %p171 = por %p169, %p170
      %p173 = scmp.ne.s32.totalorder %s158, %s172
      %p174 = scmp.eq.s32.totalorder %s22, 0
      %p175 = por %p173, %p174
      %s176 = ssub.s32 %s16, %s23
      %p177 = scmp.eq.s32.totalorder %s176, 0
      %s179 = sadd.s32 %s178, 1
      %s180 = scalar_select %p177, %s178, %s179
      %p183 = pneg %p177
      %p184 = scmp.eq.s32.totalorder %s16, 1
      %p185 = por %p183, %p184
      %p186 = scmp.ne.s32.totalorder %s178, %s181
      %p187 = scmp.eq.s32.totalorder %s16, 0
      %p188 = por %p186, %p187
      %p189 = scmp.ne.s32.totalorder %s178, %s181
      %p190 = scmp.eq.s32.totalorder %s21, 1
      %p191 = por %p189, %p190
      %p192 = scmp.ne.s32.totalorder %s181, %s182
      %p193 = scmp.eq.s32.totalorder %s21, 0
      %p194 = por %p192, %p193
      %p195 = scmp.ne.s32.totalorder %s181, %s182
      %p196 = scmp.eq.s32.totalorder %s22, 1
      %p197 = por %p195, %p196
      %p199 = scmp.ne.s32.totalorder %s182, %s198
      %p200 = scmp.eq.s32.totalorder %s22, 0
      %p201 = por %p199, %p200
      %p202 = scmp.le.s32.totalorder 1, %s16
      %p203 = scmp.lt.s32.totalorder %s16, 3
      %p204 = pnand %p202, %p203
      %p205 = pneg %p204
      // Predicated region
      $region9: #{fire_module_forward.1} parent=5 // pred_check
        _
      $region10: #{fire_module_forward.1} parent=5 // pred_check_branch
        %207 = sbr.rel (%p204) target = $region12
      $region11: #{fire_module_forward.1} parent=5 // pred_region
        %s208 = ssub.s32 %s16, 1
        // Predicated region
        $region13: #{fire_module_forward.1} parent=11 // pred_check
          %p209 = pneg %p63
        $region14: #{fire_module_forward.1} parent=11 // pred_check_branch
          %211 = sbr.rel (%p209) target = $region16
        $region15: #{fire_module_forward.1} parent=11 // pred_region
          _
        $region16: #{fire_module_forward.1} parent=11 // pred_fallthru
          _
        // Predicated region
        $region17: #{fire_module_forward.1} parent=11 // pred_check
          %p212 = pneg %p84
        $region18: #{fire_module_forward.1} parent=11 // pred_check_branch
          %214 = sbr.rel (%p212) target = $region20
        $region19: #{fire_module_forward.1} parent=11 // pred_region
          _
        $region20: #{fire_module_forward.1} parent=11 // pred_fallthru
          _
        // Predicated region
        $region21: #{fire_module_forward.1} parent=11 // pred_check
          %p215 = pneg %p105
        $region22: #{fire_module_forward.1} parent=11 // pred_check_branch
          %217 = sbr.rel (%p215) target = $region24
        $region23: #{fire_module_forward.1} parent=11 // pred_region
          _
        $region24: #{fire_module_forward.1} parent=11 // pred_fallthru
          _
        // Predicated region
        $region25: #{fire_module_forward.1} parent=11 // pred_check
          %p218 = pneg %p126
        $region26: #{fire_module_forward.1} parent=11 // pred_check_branch
          %220 = sbr.rel (%p218) target = $region28
        $region27: #{fire_module_forward.1} parent=11 // pred_region
          _
        $region28: #{fire_module_forward.1} parent=11 // pred_fallthru
          _
        // Predicated region
        $region29: #{fire_module_forward.1} parent=11 // pred_check
          %p221 = pneg %p147
        $region30: #{fire_module_forward.1} parent=11 // pred_check_branch
          %223 = sbr.rel (%p221) target = $region32
        $region31: #{fire_module_forward.1} parent=11 // pred_region
          _
        $region32: #{fire_module_forward.1} parent=11 // pred_fallthru
          _
        // Predicated region
        $region33: #{fire_module_forward.1} parent=11 // pred_check
          %p224 = pneg %p168
        $region34: #{fire_module_forward.1} parent=11 // pred_check_branch
          %226 = sbr.rel (%p224) target = $region36
        $region35: #{fire_module_forward.1} parent=11 // pred_region
          _
        $region36: #{fire_module_forward.1} parent=11 // pred_fallthru
          _
      $region12: #{fire_module_forward.1} parent=5 // pred_fallthru
        _
      %p227 = scmp.lt.s32.totalorder %s16, 2
      // Predicated region
      $region37: #{fire_module_forward.1} parent=5 // pred_check
        %p228 = pneg %p227
      $region38: #{fire_module_forward.1} parent=5 // pred_check_branch
        %230 = sbr.rel (%p228) target = $region40
      $region39: #{fire_module_forward.1} parent=5 // pred_region
        // Predicated region
        $region41: #{fire_module_forward.1} parent=39 // pred_check
          %p231 = pneg %p36
        $region42: #{fire_module_forward.1} parent=39 // pred_check_branch
          %233 = sbr.rel (%p231) target = $region44
        $region43: #{fire_module_forward.1} parent=39 // pred_region
          %p234 = scmp.lt.s32.totalorder %s16, 1
          %s235 = scalar_select %p234, %s16, 1
          %s236 = smul.addr %s235, 64
          %s237 = smul.addr %s236, 4
          %s238 = scalar_lea.vmem %s0, %s237
        $region44: #{fire_module_forward.1} parent=39 // pred_fallthru
          _
      $region40: #{fire_module_forward.1} parent=5 // pred_fallthru
        _
      %p239 = scmp.le.s32.totalorder 1, %s16
      %p240 = scmp.lt.s32.totalorder %s16, 3
      %p241 = pnand %p239, %p240
      %p242 = pneg %p241
      // Predicated region
      $region45: #{fire_module_forward.1} parent=5 // pred_check
        _
      $region46: #{fire_module_forward.1} parent=5 // pred_check_branch
        %244 = sbr.rel (%p241) target = $region48
      $region47: #{fire_module_forward.1} parent=5 // pred_region
        %s245 = ssub.s32 %s16, 1
        %p246 = scmp.lt.s32.totalorder %s21, 1
        %s247 = scalar_select %p246, %s21, 1
        %s248 = smul.addr %s247, 64
        %s249 = smul.addr %s248, 4
        %s250 = scalar_lea.vmem %s0, %s249
        %p251 = pneg %p42
        %p252 = pneg %p39
        %p253 = pneg %p63
        %p254 = pneg %p60
        %p255 = pneg %p84
        %p256 = pneg %p81
        %p257 = pneg %p105
        %p258 = pneg %p102
        %p259 = pneg %p126
        %p260 = pneg %p123
        %p261 = pneg %p147
        %p262 = pneg %p144
        %p263 = pneg %p168
        %p264 = pneg %p165
        %p265 = pneg %p194
        %p266 = pneg %p191
        %s267 = sand.u32 %s181, 1
        %s268 = scalar_lea.sflag [#allocation4], %s267
        %s269 = sand.u32 %s181, 1
        %s270 = smul.addr %s269, 512
        %s271 = scalar_lea.vmem [#allocation3], %s270
        %p272 = scmp.lt.s32.totalorder %s21, 1
        %s273 = scalar_select %p272, %s21, 1
        %s274 = smul.addr %s273, 64
        %s275 = smul.addr %s274, 4
        %s276 = scalar_lea.vmem %s0, %s275
        %v277 = vld [vmem:[%s276] sm:$0xff]
        %v278 = vld [vmem:[%s276 + $0x8] sm:$0xff]
        %v279 = vld [vmem:[%s276 + $0x10] sm:$0xff]
        %v280 = vld [vmem:[%s276 + $0x18] sm:$0xff]
        %v281 = vld [vmem:[%s276 + $0x20] sm:$0xff]
        %v282 = vld [vmem:[%s276 + $0x28] sm:$0xff]
        %v283 = vld [vmem:[%s276 + $0x30] sm:$0xff]
        %v284 = vld [vmem:[%s276 + $0x38] sm:$0xff]
        %v285 = vld [vmem:[%s276 + $0x40] sm:$0xff]
        %v286 = vld [vmem:[%s276 + $0x48] sm:$0xff]
        %v287 = vld [vmem:[%s276 + $0x50] sm:$0xff]
        %v288 = vld [vmem:[%s276 + $0x58] sm:$0xff]
        %v289 = vld [vmem:[%s276 + $0x60] sm:$0xff]
        %v290 = vld [vmem:[%s276 + $0x68] sm:$0xff]
        %v291 = vld [vmem:[%s276 + $0x70] sm:$0xff]
        %v292 = vld [vmem:[%s276 + $0x78] sm:$0xff]
        %v293 = vld [vmem:[%s276 + $0x80] sm:$0xff]
        %v294 = vld [vmem:[%s276 + $0x88] sm:$0xff]
        %v295 = vld [vmem:[%s276 + $0x90] sm:$0xff]
        %v296 = vld [vmem:[%s276 + $0x98] sm:$0xff]
        %v297 = vld [vmem:[%s276 + $0xa0] sm:$0xff]
        %v298 = vld [vmem:[%s276 + $0xa8] sm:$0xff]
        %v299 = vld [vmem:[%s276 + $0xb0] sm:$0xff]
        %v300 = vld [vmem:[%s276 + $0xb8] sm:$0xff]
        %v301 = vld [vmem:[%s276 + $0xc0] sm:$0xff]
        %v302 = vld [vmem:[%s276 + $0xc8] sm:$0xff]
        %v303 = vld [vmem:[%s276 + $0xd0] sm:$0xff]
        %v304 = vld [vmem:[%s276 + $0xd8] sm:$0xff]
        %v305 = vld [vmem:[%s276 + $0xe0] sm:$0xff]
        %v306 = vld [vmem:[%s276 + $0xe8] sm:$0xff]
        %v307 = vld [vmem:[%s276 + $0xf0] sm:$0xff]
        %v308 = vld [vmem:[%s276 + $0xf8] sm:$0xff]
        %v309 = vld [vmem:[%s1] sm:$0xf]
        %v310 = vld [vmem:[%s1 + $0x4] sm:$0xf]
        %v311 = vld [vmem:[%s1 + $0x8] sm:$0xf]
        %v312 = vld [vmem:[%s1 + $0xc] sm:$0xf]
        %v313 = vld [vmem:[%s1 + $0x10] sm:$0xf]
        %v314 = vld [vmem:[%s1 + $0x14] sm:$0xf]
        %v315 = vld [vmem:[%s1 + $0x18] sm:$0xf]
        %v316 = vld [vmem:[%s1 + $0x1c] sm:$0xf]
        %v317 = vld [vmem:[%s1 + $0x20] sm:$0xf]
        %v318 = vld [vmem:[%s1 + $0x24] sm:$0xf]
        %v319 = vld [vmem:[%s1 + $0x28] sm:$0xf]
        %v320 = vld [vmem:[%s1 + $0x2c] sm:$0xf]
        %v321 = vld [vmem:[%s1 + $0x30] sm:$0xf]
        %v322 = vld [vmem:[%s1 + $0x34] sm:$0xf]
        %v323 = vld [vmem:[%s1 + $0x38] sm:$0xf]
        %v324 = vld [vmem:[%s1 + $0x3c] sm:$0xf]
        %v325 = vld [vmem:[%s1 + $0x40] sm:$0xf]
        %v326 = vld [vmem:[%s1 + $0x44] sm:$0xf]
        %v327 = vld [vmem:[%s1 + $0x48] sm:$0xf]
        %v328 = vld [vmem:[%s1 + $0x4c] sm:$0xf]
        %v329 = vld [vmem:[%s1 + $0x50] sm:$0xf]
        %v330 = vld [vmem:[%s1 + $0x54] sm:$0xf]
        %v331 = vld [vmem:[%s1 + $0x58] sm:$0xf]
        %v332 = vld [vmem:[%s1 + $0x5c] sm:$0xf]
        %v333 = vld [vmem:[%s1 + $0x60] sm:$0xf]
        %v334 = vld [vmem:[%s1 + $0x64] sm:$0xf]
        %v335 = vld [vmem:[%s1 + $0x68] sm:$0xf]
        %v336 = vld [vmem:[%s1 + $0x6c] sm:$0xf]
        %v337 = vld [vmem:[%s1 + $0x70] sm:$0xf]
        %v338 = vld [vmem:[%s1 + $0x74] sm:$0xf]
        %v339 = vld [vmem:[%s1 + $0x78] sm:$0xf]
        %v340 = vld [vmem:[%s1 + $0x7c] sm:$0xf]
        %v341 = vld [vmem:[%s2] sm:$0x1]
        %v343 = vperm.slane %v341, 0
        %v377 = vunpack.c.l.b16 %v277
        %v378 = vunpack.c.h.b16 %v277
        %v379 = vunpack.c.l.b16 %v278
        %v380 = vunpack.c.h.b16 %v278
        %v381 = vunpack.c.l.b16 %v279
        %v382 = vunpack.c.h.b16 %v279
        %v383 = vunpack.c.l.b16 %v280
        %v384 = vunpack.c.h.b16 %v280
        %v385 = vunpack.c.l.b16 %v281
        %v386 = vunpack.c.h.b16 %v281
        %v387 = vunpack.c.l.b16 %v282
        %v388 = vunpack.c.h.b16 %v282
        %v389 = vunpack.c.l.b16 %v283
        %v390 = vunpack.c.h.b16 %v283
        %v391 = vunpack.c.l.b16 %v284
        %v392 = vunpack.c.h.b16 %v284
        %v393 = vunpack.c.l.b16 %v285
        %v394 = vunpack.c.h.b16 %v285
        %v395 = vunpack.c.l.b16 %v286
        %v396 = vunpack.c.h.b16 %v286
        %v397 = vunpack.c.l.b16 %v287
        %v398 = vunpack.c.h.b16 %v287
        %v399 = vunpack.c.l.b16 %v288
        %v400 = vunpack.c.h.b16 %v288
        %v401 = vunpack.c.l.b16 %v289
        %v402 = vunpack.c.h.b16 %v289
        %v403 = vunpack.c.l.b16 %v290
        %v404 = vunpack.c.h.b16 %v290
        %v405 = vunpack.c.l.b16 %v291
        %v406 = vunpack.c.h.b16 %v291
        %v407 = vunpack.c.l.b16 %v292
        %v408 = vunpack.c.h.b16 %v292
        %v409 = vunpack.c.l.b16 %v293
        %v410 = vunpack.c.h.b16 %v293
        %v411 = vunpack.c.l.b16 %v294
        %v412 = vunpack.c.h.b16 %v294
        %v413 = vunpack.c.l.b16 %v295
        %v414 = vunpack.c.h.b16 %v295
        %v415 = vunpack.c.l.b16 %v296
        %v416 = vunpack.c.h.b16 %v296
        %v417 = vunpack.c.l.b16 %v297
        %v418 = vunpack.c.h.b16 %v297
        %v419 = vunpack.c.l.b16 %v298
        %v420 = vunpack.c.h.b16 %v298
        %v421 = vunpack.c.l.b16 %v299
        %v422 = vunpack.c.h.b16 %v299
        %v423 = vunpack.c.l.b16 %v300
        %v424 = vunpack.c.h.b16 %v300
        %v425 = vunpack.c.l.b16 %v301
        %v426 = vunpack.c.h.b16 %v301
        %v427 = vunpack.c.l.b16 %v302
        %v428 = vunpack.c.h.b16 %v302
        %v429 = vunpack.c.l.b16 %v303
        %v430 = vunpack.c.h.b16 %v303
        %v431 = vunpack.c.l.b16 %v304
        %v432 = vunpack.c.h.b16 %v304
        %v433 = vunpack.c.l.b16 %v305
        %v434 = vunpack.c.h.b16 %v305
        %v435 = vunpack.c.l.b16 %v306
        %v436 = vunpack.c.h.b16 %v306
        %v437 = vunpack.c.l.b16 %v307
        %v438 = vunpack.c.h.b16 %v307
        %v439 = vunpack.c.l.b16 %v308
        %v440 = vunpack.c.h.b16 %v308
        %v441 = vpack.c.b16 %v379, %v377
        %v442 = vpack.c.b16 %v380, %v378
        %v443 = vpack.c.b16 %v383, %v381
        %v444 = vpack.c.b16 %v384, %v382
        %v445 = vpack.c.b16 %v387, %v385
        %v446 = vpack.c.b16 %v388, %v386
        %v447 = vpack.c.b16 %v391, %v389
        %v448 = vpack.c.b16 %v392, %v390
        %v449 = vpack.c.b16 %v395, %v393
        %v450 = vpack.c.b16 %v396, %v394
        %v451 = vpack.c.b16 %v399, %v397
        %v452 = vpack.c.b16 %v400, %v398
        %v453 = vpack.c.b16 %v403, %v401
        %v454 = vpack.c.b16 %v404, %v402
        %v455 = vpack.c.b16 %v407, %v405
        %v456 = vpack.c.b16 %v408, %v406
        %v457 = vpack.c.b16 %v411, %v409
        %v458 = vpack.c.b16 %v412, %v410
        %v459 = vpack.c.b16 %v415, %v413
        %v460 = vpack.c.b16 %v416, %v414
        %v461 = vpack.c.b16 %v419, %v417
        %v462 = vpack.c.b16 %v420, %v418
        %v463 = vpack.c.b16 %v423, %v421
        %v464 = vpack.c.b16 %v424, %v422
        %v465 = vpack.c.b16 %v427, %v425
        %v466 = vpack.c.b16 %v428, %v426
        %v467 = vpack.c.b16 %v431, %v429
        %v468 = vpack.c.b16 %v432, %v430
        %v469 = vpack.c.b16 %v435, %v433
        %v470 = vpack.c.b16 %v436, %v434
        %v471 = vpack.c.b16 %v439, %v437
        %v472 = vpack.c.b16 %v440, %v438
        %v537 = vunpack.c.l.b16 %v309
        %v538 = vunpack.c.l.b16 %v310
        %v539 = vunpack.c.l.b16 %v311
        %v540 = vunpack.c.l.b16 %v312
        %v541 = vunpack.c.l.b16 %v313
        %v542 = vunpack.c.l.b16 %v314
        %v543 = vunpack.c.l.b16 %v315
        %v544 = vunpack.c.l.b16 %v316
        %v545 = vunpack.c.l.b16 %v317
        %v546 = vunpack.c.l.b16 %v318
        %v547 = vunpack.c.l.b16 %v319
        %v548 = vunpack.c.l.b16 %v320
        %v549 = vunpack.c.l.b16 %v321
        %v550 = vunpack.c.l.b16 %v322
        %v551 = vunpack.c.l.b16 %v323
        %v552 = vunpack.c.l.b16 %v324
        %v553 = vunpack.c.l.b16 %v325
        %v554 = vunpack.c.l.b16 %v326
        %v555 = vunpack.c.l.b16 %v327
        %v556 = vunpack.c.l.b16 %v328
        %v557 = vunpack.c.l.b16 %v329
        %v558 = vunpack.c.l.b16 %v330
        %v559 = vunpack.c.l.b16 %v331
        %v560 = vunpack.c.l.b16 %v332
        %v561 = vunpack.c.l.b16 %v333
        %v562 = vunpack.c.l.b16 %v334
        %v563 = vunpack.c.l.b16 %v335
        %v564 = vunpack.c.l.b16 %v336
        %v565 = vunpack.c.l.b16 %v337
        %v566 = vunpack.c.l.b16 %v338
        %v567 = vunpack.c.l.b16 %v339
        %v568 = vunpack.c.l.b16 %v340
        %v569 = vpack.c.b16 %v538, %v537
        %v570 = vpack.c.b16 %v540, %v539
        %v571 = vpack.c.b16 %v542, %v541
        %v572 = vpack.c.b16 %v544, %v543
        %v573 = vpack.c.b16 %v546, %v545
        %v574 = vpack.c.b16 %v548, %v547
        %v575 = vpack.c.b16 %v550, %v549
        %v576 = vpack.c.b16 %v552, %v551
        %v577 = vpack.c.b16 %v554, %v553
        %v578 = vpack.c.b16 %v556, %v555
        %v579 = vpack.c.b16 %v558, %v557
        %v580 = vpack.c.b16 %v560, %v559
        %v581 = vpack.c.b16 %v562, %v561
        %v582 = vpack.c.b16 %v564, %v563
        %v583 = vpack.c.b16 %v566, %v565
        %v584 = vpack.c.b16 %v568, %v567
        %601 = vmatpush.bf16.msra.mxu0 %v576
        %602 = vmatpush.bf16.msra.mxu0 %v575
        %603 = vmatpush.bf16.msra.mxu0 %v574
        %604 = vmatpush.bf16.msra.mxu0 %v573
        %605 = vmatpush.bf16.msra.mxu0 %v572
        %606 = vmatpush.bf16.msra.mxu0 %v571
        %607 = vmatpush.bf16.msra.mxu0 %v570
        %608 = vmatpush.bf16.msra.mxu0 %v569
        %609 = vmatmul.bf16.gmra.mxu0 %v441
        %v610 = vpop.f32.mrf.mxu0
        %v611 = vadd.f32 %v343, %v610
        %v612 = vpop.f32.mrf.mxu0
        %v613 = vadd.f32 %v343, %v612
        %614 = vmatmul.bf16.gmra.mxu0 %v443
        %v615 = vpop.f32.mrf.mxu0
        %v616 = vadd.f32 %v343, %v615
        %v617 = vpop.f32.mrf.mxu0
        %v618 = vadd.f32 %v343, %v617
        %619 = vmatmul.bf16.gmra.mxu0 %v445
        %v620 = vpop.f32.mrf.mxu0
        %v621 = vadd.f32 %v343, %v620
        %v622 = vpop.f32.mrf.mxu0
        %v623 = vadd.f32 %v343, %v622
        %624 = vmatmul.bf16.gmra.mxu0 %v447
        %v625 = vpop.f32.mrf.mxu0
        %v626 = vadd.f32 %v343, %v625
        %v627 = vpop.f32.mrf.mxu0
        %v628 = vadd.f32 %v343, %v627
        %629 = vmatmul.bf16.gmra.mxu0 %v449
        %v630 = vpop.f32.mrf.mxu0
        %v631 = vadd.f32 %v343, %v630
        %v632 = vpop.f32.mrf.mxu0
        %v633 = vadd.f32 %v343, %v632
        %634 = vmatmul.bf16.gmra.mxu0 %v451
        %v635 = vpop.f32.mrf.mxu0
        %v636 = vadd.f32 %v343, %v635
        %v637 = vpop.f32.mrf.mxu0
        %v638 = vadd.f32 %v343, %v637
        %639 = vmatmul.bf16.gmra.mxu0 %v453
        %v640 = vpop.f32.mrf.mxu0
        %v641 = vadd.f32 %v343, %v640
        %v642 = vpop.f32.mrf.mxu0
        %v643 = vadd.f32 %v343, %v642
        %644 = vmatmul.bf16.gmra.mxu0 %v455
        %v645 = vpop.f32.mrf.mxu0
        %v646 = vadd.f32 %v343, %v645
        %v647 = vpop.f32.mrf.mxu0
        %v648 = vadd.f32 %v343, %v647
        %649 = vmatmul.bf16.gmra.mxu0 %v457
        %v650 = vpop.f32.mrf.mxu0
        %v651 = vadd.f32 %v343, %v650
        %v652 = vpop.f32.mrf.mxu0
        %v653 = vadd.f32 %v343, %v652
        %654 = vmatmul.bf16.gmra.mxu0 %v459
        %v655 = vpop.f32.mrf.mxu0
        %v656 = vadd.f32 %v343, %v655
        %v657 = vpop.f32.mrf.mxu0
        %v658 = vadd.f32 %v343, %v657
        %659 = vmatmul.bf16.gmra.mxu0 %v461
        %v660 = vpop.f32.mrf.mxu0
        %v661 = vadd.f32 %v343, %v660
        %v662 = vpop.f32.mrf.mxu0
        %v663 = vadd.f32 %v343, %v662
        %664 = vmatmul.bf16.gmra.mxu0 %v463
        %v665 = vpop.f32.mrf.mxu0
        %v666 = vadd.f32 %v343, %v665
        %v667 = vpop.f32.mrf.mxu0
        %v668 = vadd.f32 %v343, %v667
        %669 = vmatmul.bf16.gmra.mxu0 %v465
        %v670 = vpop.f32.mrf.mxu0
        %v671 = vadd.f32 %v343, %v670
        %v672 = vpop.f32.mrf.mxu0
        %v673 = vadd.f32 %v343, %v672
        %674 = vmatmul.bf16.gmra.mxu0 %v467
        %v675 = vpop.f32.mrf.mxu0
        %v676 = vadd.f32 %v343, %v675
        %v677 = vpop.f32.mrf.mxu0
        %v678 = vadd.f32 %v343, %v677
        %679 = vmatmul.bf16.gmra.mxu0 %v469
        %v680 = vpop.f32.mrf.mxu0
        %v681 = vadd.f32 %v343, %v680
        %v682 = vpop.f32.mrf.mxu0
        %v683 = vadd.f32 %v343, %v682
        %684 = vmatmul.bf16.gmra.mxu0 %v471
        %v685 = vpop.f32.mrf.mxu0
        %v686 = vadd.f32 %v343, %v685
        %v687 = vpop.f32.mrf.mxu0
        %v688 = vadd.f32 %v343, %v687
        %689 = vdwg.mxu0
        %690 = vmatpush.bf16.msra.mxu0 %v584
        %691 = vmatpush.bf16.msra.mxu0 %v583
        %692 = vmatpush.bf16.msra.mxu0 %v582
        %693 = vmatpush.bf16.msra.mxu0 %v581
        %694 = vmatpush.bf16.msra.mxu0 %v580
        %695 = vmatpush.bf16.msra.mxu0 %v579
        %696 = vmatpush.bf16.msra.mxu0 %v578
        %697 = vmatpush.bf16.msra.mxu0 %v577
        %698 = vmatmul.bf16.gmra.mxu0 %v442
        %v699 = vpop.f32.mrf.mxu0
        %v700 = vadd.f32 %v611, %v699
        %v701 = vpop.f32.mrf.mxu0
        %v702 = vadd.f32 %v613, %v701
        %703 = vmatmul.bf16.gmra.mxu0 %v444
        %v704 = vpop.f32.mrf.mxu0
        %v705 = vadd.f32 %v616, %v704
        %v706 = vpop.f32.mrf.mxu0
        %v707 = vadd.f32 %v618, %v706
        %708 = vmatmul.bf16.gmra.mxu0 %v446
        %v709 = vpop.f32.mrf.mxu0
        %v710 = vadd.f32 %v621, %v709
        %v711 = vpop.f32.mrf.mxu0
        %v712 = vadd.f32 %v623, %v711
        %713 = vmatmul.bf16.gmra.mxu0 %v448
        %v714 = vpop.f32.mrf.mxu0
        %v715 = vadd.f32 %v626, %v714
        %v716 = vpop.f32.mrf.mxu0
        %v717 = vadd.f32 %v628, %v716
        %718 = vmatmul.bf16.gmra.mxu0 %v450
        %v719 = vpop.f32.mrf.mxu0
        %v720 = vadd.f32 %v631, %v719
        %v721 = vpop.f32.mrf.mxu0
        %v722 = vadd.f32 %v633, %v721
        %723 = vmatmul.bf16.gmra.mxu0 %v452
        %v724 = vpop.f32.mrf.mxu0
        %v725 = vadd.f32 %v636, %v724
        %v726 = vpop.f32.mrf.mxu0
        %v727 = vadd.f32 %v638, %v726
        %728 = vmatmul.bf16.gmra.mxu0 %v454
        %v729 = vpop.f32.mrf.mxu0
        %v730 = vadd.f32 %v641, %v729
        %v731 = vpop.f32.mrf.mxu0
        %v732 = vadd.f32 %v643, %v731
        %733 = vmatmul.bf16.gmra.mxu0 %v456
        %v734 = vpop.f32.mrf.mxu0
        %v735 = vadd.f32 %v646, %v734
        %v736 = vpop.f32.mrf.mxu0
        %v737 = vadd.f32 %v648, %v736
        %738 = vmatmul.bf16.gmra.mxu0 %v458
        %v739 = vpop.f32.mrf.mxu0
        %v740 = vadd.f32 %v651, %v739
        %v741 = vpop.f32.mrf.mxu0
        %v742 = vadd.f32 %v653, %v741
        %743 = vmatmul.bf16.gmra.mxu0 %v460
        %v744 = vpop.f32.mrf.mxu0
        %v745 = vadd.f32 %v656, %v744
        %v746 = vpop.f32.mrf.mxu0
        %v747 = vadd.f32 %v658, %v746
        %748 = vmatmul.bf16.gmra.mxu0 %v462
        %v749 = vpop.f32.mrf.mxu0
        %v750 = vadd.f32 %v661, %v749
        %v751 = vpop.f32.mrf.mxu0
        %v752 = vadd.f32 %v663, %v751
        %753 = vmatmul.bf16.gmra.mxu0 %v464
        %v754 = vpop.f32.mrf.mxu0
        %v755 = vadd.f32 %v666, %v754
        %v756 = vpop.f32.mrf.mxu0
        %v757 = vadd.f32 %v668, %v756
        %758 = vmatmul.bf16.gmra.mxu0 %v466
        %v759 = vpop.f32.mrf.mxu0
        %v760 = vadd.f32 %v671, %v759
        %v761 = vpop.f32.mrf.mxu0
        %v762 = vadd.f32 %v673, %v761
        %763 = vmatmul.bf16.gmra.mxu0 %v468
        %v764 = vpop.f32.mrf.mxu0
        %v765 = vadd.f32 %v676, %v764
        %v766 = vpop.f32.mrf.mxu0
        %v767 = vadd.f32 %v678, %v766
        %768 = vmatmul.bf16.gmra.mxu0 %v470
        %v769 = vpop.f32.mrf.mxu0
        %v770 = vadd.f32 %v681, %v769
        %v771 = vpop.f32.mrf.mxu0
        %v772 = vadd.f32 %v683, %v771
        %773 = vmatmul.bf16.gmra.mxu0 %v472
        %v774 = vpop.f32.mrf.mxu0
        %v775 = vadd.f32 %v686, %v774
        %v776 = vpop.f32.mrf.mxu0
        %v777 = vadd.f32 %v688, %v776
        %778 = vdwg.mxu0
        %v779 = vpack.c.bf16 %v702, %v700
        %v780 = vpack.c.bf16 %v707, %v705
        %v781 = vpack.c.bf16 %v712, %v710
        %v782 = vpack.c.bf16 %v717, %v715
        %v783 = vpack.c.bf16 %v722, %v720
        %v784 = vpack.c.bf16 %v727, %v725
        %v785 = vpack.c.bf16 %v732, %v730
        %v786 = vpack.c.bf16 %v737, %v735
        %v787 = vpack.c.bf16 %v742, %v740
        %v788 = vpack.c.bf16 %v747, %v745
        %v789 = vpack.c.bf16 %v752, %v750
        %v790 = vpack.c.bf16 %v757, %v755
        %v791 = vpack.c.bf16 %v762, %v760
        %v792 = vpack.c.bf16 %v767, %v765
        %v793 = vpack.c.bf16 %v772, %v770
        %v794 = vpack.c.bf16 %v777, %v775
        %v795 = vld [vmem:[%s3] sm:$0xf]
        %v796 = vld [vmem:[%s3 + $0x4] sm:$0xf]
        %v797 = vld [vmem:[%s3 + $0x8] sm:$0xf]
        %v798 = vld [vmem:[%s3 + $0xc] sm:$0xf]
        %v799 = vld [vmem:[%s3 + $0x10] sm:$0xf]
        %v800 = vld [vmem:[%s3 + $0x14] sm:$0xf]
        %v801 = vld [vmem:[%s3 + $0x18] sm:$0xf]
        %v802 = vld [vmem:[%s3 + $0x1c] sm:$0xf]
        %v803 = vld [vmem:[%s3 + $0x20] sm:$0xf]
        %v804 = vld [vmem:[%s3 + $0x24] sm:$0xf]
        %v805 = vld [vmem:[%s3 + $0x28] sm:$0xf]
        %v806 = vld [vmem:[%s3 + $0x2c] sm:$0xf]
        %v807 = vld [vmem:[%s3 + $0x30] sm:$0xf]
        %v808 = vld [vmem:[%s3 + $0x34] sm:$0xf]
        %v809 = vld [vmem:[%s3 + $0x38] sm:$0xf]
        %v810 = vld [vmem:[%s3 + $0x3c] sm:$0xf]
        %v811 = vld [vmem:[%s4] sm:$0x1]
        %v813 = vperm.slane %v811, 0
        %v831 = vunpack.c.l.b16 %v795
        %v832 = vunpack.c.l.b16 %v796
        %v833 = vunpack.c.l.b16 %v797
        %v834 = vunpack.c.l.b16 %v798
        %v835 = vunpack.c.l.b16 %v799
        %v836 = vunpack.c.l.b16 %v800
        %v837 = vunpack.c.l.b16 %v801
        %v838 = vunpack.c.l.b16 %v802
        %v839 = vunpack.c.l.b16 %v803
        %v840 = vunpack.c.l.b16 %v804
        %v841 = vunpack.c.l.b16 %v805
        %v842 = vunpack.c.l.b16 %v806
        %v843 = vunpack.c.l.b16 %v807
        %v844 = vunpack.c.l.b16 %v808
        %v845 = vunpack.c.l.b16 %v809
        %v846 = vunpack.c.l.b16 %v810
        %v847 = vpack.c.b16 %v832, %v831
        %v848 = vpack.c.b16 %v834, %v833
        %v849 = vpack.c.b16 %v836, %v835
        %v850 = vpack.c.b16 %v838, %v837
        %v851 = vpack.c.b16 %v840, %v839
        %v852 = vpack.c.b16 %v842, %v841
        %v853 = vpack.c.b16 %v844, %v843
        %v854 = vpack.c.b16 %v846, %v845
        %863 = vmatpush.bf16.msra.mxu0 %v854
        %864 = vmatpush.bf16.msra.mxu0 %v853
        %865 = vmatpush.bf16.msra.mxu0 %v852
        %866 = vmatpush.bf16.msra.mxu0 %v851
        %867 = vmatpush.bf16.msra.mxu0 %v850
        %868 = vmatpush.bf16.msra.mxu0 %v849
        %869 = vmatpush.bf16.msra.mxu0 %v848
        %870 = vmatpush.bf16.msra.mxu0 %v847
        %871 = vmatmul.bf16.gmra.mxu0 %v779
        %v872 = vpop.f32.mrf.mxu0
        %v873 = vadd.f32 %v813, %v872
        %v874 = vpop.f32.mrf.mxu0
        %v875 = vadd.f32 %v813, %v874
        %876 = vmatmul.bf16.gmra.mxu0 %v780
        %v877 = vpop.f32.mrf.mxu0
        %v878 = vadd.f32 %v813, %v877
        %v879 = vpop.f32.mrf.mxu0
        %v880 = vadd.f32 %v813, %v879
        %881 = vmatmul.bf16.gmra.mxu0 %v781
        %v882 = vpop.f32.mrf.mxu0
        %v883 = vadd.f32 %v813, %v882
        %v884 = vpop.f32.mrf.mxu0
        %v885 = vadd.f32 %v813, %v884
        %886 = vmatmul.bf16.gmra.mxu0 %v782
        %v887 = vpop.f32.mrf.mxu0
        %v888 = vadd.f32 %v813, %v887
        %v889 = vpop.f32.mrf.mxu0
        %v890 = vadd.f32 %v813, %v889
        %891 = vmatmul.bf16.gmra.mxu0 %v783
        %v892 = vpop.f32.mrf.mxu0
        %v893 = vadd.f32 %v813, %v892
        %v894 = vpop.f32.mrf.mxu0
        %v895 = vadd.f32 %v813, %v894
        %896 = vmatmul.bf16.gmra.mxu0 %v784
        %v897 = vpop.f32.mrf.mxu0
        %v898 = vadd.f32 %v813, %v897
        %v899 = vpop.f32.mrf.mxu0
        %v900 = vadd.f32 %v813, %v899
        %901 = vmatmul.bf16.gmra.mxu0 %v785
        %v902 = vpop.f32.mrf.mxu0
        %v903 = vadd.f32 %v813, %v902
        %v904 = vpop.f32.mrf.mxu0
        %v905 = vadd.f32 %v813, %v904
        %906 = vmatmul.bf16.gmra.mxu0 %v786
        %v907 = vpop.f32.mrf.mxu0
        %v908 = vadd.f32 %v813, %v907
        %v909 = vpop.f32.mrf.mxu0
        %v910 = vadd.f32 %v813, %v909
        %911 = vmatmul.bf16.gmra.mxu0 %v787
        %v912 = vpop.f32.mrf.mxu0
        %v913 = vadd.f32 %v813, %v912
        %v914 = vpop.f32.mrf.mxu0
        %v915 = vadd.f32 %v813, %v914
        %916 = vmatmul.bf16.gmra.mxu0 %v788
        %v917 = vpop.f32.mrf.mxu0
        %v918 = vadd.f32 %v813, %v917
        %v919 = vpop.f32.mrf.mxu0
        %v920 = vadd.f32 %v813, %v919
        %921 = vmatmul.bf16.gmra.mxu0 %v789
        %v922 = vpop.f32.mrf.mxu0
        %v923 = vadd.f32 %v813, %v922
        %v924 = vpop.f32.mrf.mxu0
        %v925 = vadd.f32 %v813, %v924
        %926 = vmatmul.bf16.gmra.mxu0 %v790
        %v927 = vpop.f32.mrf.mxu0
        %v928 = vadd.f32 %v813, %v927
        %v929 = vpop.f32.mrf.mxu0
        %v930 = vadd.f32 %v813, %v929
        %931 = vmatmul.bf16.gmra.mxu0 %v791
        %v932 = vpop.f32.mrf.mxu0
        %v933 = vadd.f32 %v813, %v932
        %v934 = vpop.f32.mrf.mxu0
        %v935 = vadd.f32 %v813, %v934
        %936 = vmatmul.bf16.gmra.mxu0 %v792
        %v937 = vpop.f32.mrf.mxu0
        %v938 = vadd.f32 %v813, %v937
        %v939 = vpop.f32.mrf.mxu0
        %v940 = vadd.f32 %v813, %v939
        %941 = vmatmul.bf16.gmra.mxu0 %v793
        %v942 = vpop.f32.mrf.mxu0
        %v943 = vadd.f32 %v813, %v942
        %v944 = vpop.f32.mrf.mxu0
        %v945 = vadd.f32 %v813, %v944
        %946 = vmatmul.bf16.gmra.mxu0 %v794
        %v947 = vpop.f32.mrf.mxu0
        %v948 = vadd.f32 %v813, %v947
        %v949 = vpop.f32.mrf.mxu0
        %v950 = vadd.f32 %v813, %v949
        %951 = vdwg.mxu0
        %v952 = vunpack.c.l.bf16 %v277
        %v953 = vunpack.c.l.bf16 %v278
        %v954 = vunpack.c.l.bf16 %v279
        %v955 = vunpack.c.l.bf16 %v280
        %v956 = vunpack.c.l.bf16 %v281
        %v957 = vunpack.c.l.bf16 %v282
        %v958 = vunpack.c.l.bf16 %v283
        %v959 = vunpack.c.l.bf16 %v284
        %v960 = vunpack.c.l.bf16 %v285
        %v961 = vunpack.c.l.bf16 %v286
        %v962 = vunpack.c.l.bf16 %v287
        %v963 = vunpack.c.l.bf16 %v288
        %v964 = vunpack.c.l.bf16 %v289
        %v965 = vunpack.c.l.bf16 %v290
        %v966 = vunpack.c.l.bf16 %v291
        %v967 = vunpack.c.l.bf16 %v292
        %v968 = vunpack.c.l.bf16 %v293
        %v969 = vunpack.c.l.bf16 %v294
        %v970 = vunpack.c.l.bf16 %v295
        %v971 = vunpack.c.l.bf16 %v296
        %v972 = vunpack.c.l.bf16 %v297
        %v973 = vunpack.c.l.bf16 %v298
        %v974 = vunpack.c.l.bf16 %v299
        %v975 = vunpack.c.l.bf16 %v300
        %v976 = vunpack.c.l.bf16 %v301
        %v977 = vunpack.c.l.bf16 %v302
        %v978 = vunpack.c.l.bf16 %v303
        %v979 = vunpack.c.l.bf16 %v304
        %v980 = vunpack.c.l.bf16 %v305
        %v981 = vunpack.c.l.bf16 %v306
        %v982 = vunpack.c.l.bf16 %v307
        %v983 = vunpack.c.l.bf16 %v308
        %v984 = vadd.f32 %v873, %v952
        %v985 = vadd.f32 %v875, %v953
        %v986 = vadd.f32 %v878, %v954
        %v987 = vadd.f32 %v880, %v955
        %v988 = vadd.f32 %v883, %v956
        %v989 = vadd.f32 %v885, %v957
        %v990 = vadd.f32 %v888, %v958
        %v991 = vadd.f32 %v890, %v959
        %v992 = vadd.f32 %v893, %v960
        %v993 = vadd.f32 %v895, %v961
        %v994 = vadd.f32 %v898, %v962
        %v995 = vadd.f32 %v900, %v963
        %v996 = vadd.f32 %v903, %v964
        %v997 = vadd.f32 %v905, %v965
        %v998 = vadd.f32 %v908, %v966
        %v999 = vadd.f32 %v910, %v967
        %v1000 = vadd.f32 %v913, %v968
        %v1001 = vadd.f32 %v915, %v969
        %v1002 = vadd.f32 %v918, %v970
        %v1003 = vadd.f32 %v920, %v971
        %v1004 = vadd.f32 %v923, %v972
        %v1005 = vadd.f32 %v925, %v973
        %v1006 = vadd.f32 %v928, %v974
        %v1007 = vadd.f32 %v930, %v975
        %v1008 = vadd.f32 %v933, %v976
        %v1009 = vadd.f32 %v935, %v977
        %v1010 = vadd.f32 %v938, %v978
        %v1011 = vadd.f32 %v940, %v979
        %v1012 = vadd.f32 %v943, %v980
        %v1013 = vadd.f32 %v945, %v981
        %v1014 = vadd.f32 %v948, %v982
        %v1015 = vadd.f32 %v950, %v983
        %v1016 = vmax.f32 %v984, 0.0
        %v1017 = vmax.f32 %v985, 0.0
        %v1018 = vmax.f32 %v986, 0.0
        %v1019 = vmax.f32 %v987, 0.0
        %v1020 = vmax.f32 %v988, 0.0
        %v1021 = vmax.f32 %v989, 0.0
        %v1022 = vmax.f32 %v990, 0.0
        %v1023 = vmax.f32 %v991, 0.0
        %v1024 = vmax.f32 %v992, 0.0
        %v1025 = vmax.f32 %v993, 0.0
        %v1026 = vmax.f32 %v994, 0.0
        %v1027 = vmax.f32 %v995, 0.0
        %v1028 = vmax.f32 %v996, 0.0
        %v1029 = vmax.f32 %v997, 0.0
        %v1030 = vmax.f32 %v998, 0.0
        %v1031 = vmax.f32 %v999, 0.0
        %v1032 = vmax.f32 %v1000, 0.0
        %v1033 = vmax.f32 %v1001, 0.0
        %v1034 = vmax.f32 %v1002, 0.0
        %v1035 = vmax.f32 %v1003, 0.0
        %v1036 = vmax.f32 %v1004, 0.0
        %v1037 = vmax.f32 %v1005, 0.0
        %v1038 = vmax.f32 %v1006, 0.0
        %v1039 = vmax.f32 %v1007, 0.0
        %v1040 = vmax.f32 %v1008, 0.0
        %v1041 = vmax.f32 %v1009, 0.0
        %v1042 = vmax.f32 %v1010, 0.0
        %v1043 = vmax.f32 %v1011, 0.0
        %v1044 = vmax.f32 %v1012, 0.0
        %v1045 = vmax.f32 %v1013, 0.0
        %v1046 = vmax.f32 %v1014, 0.0
        %v1047 = vmax.f32 %v1015, 0.0
        %1048 = vst [vmem:[%s271] sm:$0xff] %v1016
        %1049 = vst [vmem:[%s271 + $0x10] sm:$0xff] %v1017
        %1050 = vst [vmem:[%s271 + $0x20] sm:$0xff] %v1018
        %1051 = vst [vmem:[%s271 + $0x30] sm:$0xff] %v1019
        %1052 = vst [vmem:[%s271 + $0x40] sm:$0xff] %v1020
        %1053 = vst [vmem:[%s271 + $0x50] sm:$0xff] %v1021
        %1054 = vst [vmem:[%s271 + $0x60] sm:$0xff] %v1022
        %1055 = vst [vmem:[%s271 + $0x70] sm:$0xff] %v1023
        %1056 = vst [vmem:[%s271 + $0x80] sm:$0xff] %v1024
        %1057 = vst [vmem:[%s271 + $0x90] sm:$0xff] %v1025
        %1058 = vst [vmem:[%s271 + $0xa0] sm:$0xff] %v1026
        %1059 = vst [vmem:[%s271 + $0xb0] sm:$0xff] %v1027
        %1060 = vst [vmem:[%s271 + $0xc0] sm:$0xff] %v1028
        %1061 = vst [vmem:[%s271 + $0xd0] sm:$0xff] %v1029
        %1062 = vst [vmem:[%s271 + $0xe0] sm:$0xff] %v1030
        %1063 = vst [vmem:[%s271 + $0xf0] sm:$0xff] %v1031
        %1064 = vst [vmem:[%s271 + $0x100] sm:$0xff] %v1032
        %1065 = vst [vmem:[%s271 + $0x110] sm:$0xff] %v1033
        %1066 = vst [vmem:[%s271 + $0x120] sm:$0xff] %v1034
        %1067 = vst [vmem:[%s271 + $0x130] sm:$0xff] %v1035
        %1068 = vst [vmem:[%s271 + $0x140] sm:$0xff] %v1036
        %1069 = vst [vmem:[%s271 + $0x150] sm:$0xff] %v1037
        %1070 = vst [vmem:[%s271 + $0x160] sm:$0xff] %v1038
        %1071 = vst [vmem:[%s271 + $0x170] sm:$0xff] %v1039
        %1072 = vst [vmem:[%s271 + $0x180] sm:$0xff] %v1040
        %1073 = vst [vmem:[%s271 + $0x190] sm:$0xff] %v1041
        %1074 = vst [vmem:[%s271 + $0x1a0] sm:$0xff] %v1042
        %1075 = vst [vmem:[%s271 + $0x1b0] sm:$0xff] %v1043
        %1076 = vst [vmem:[%s271 + $0x1c0] sm:$0xff] %v1044
        %1077 = vst [vmem:[%s271 + $0x1d0] sm:$0xff] %v1045
        %1078 = vst [vmem:[%s271 + $0x1e0] sm:$0xff] %v1046
        %1079 = vst [vmem:[%s271 + $0x1f0] sm:$0xff] %v1047
        %1080 = vst [vmem:[#allocation2] sm:$0xff] 0.0
        %1081 = vst [vmem:[#allocation2 + $0x8] sm:$0xff] 0.0
        %1082 = vst [vmem:[#allocation2 + $0x10] sm:$0x3] 0.0
        %1083 = vst [vmem:[#allocation2 + $0x18] sm:$0xff] 0.0
        %1084 = vst [vmem:[#allocation2 + $0x20] sm:$0xff] 0.0
        %1085 = vst [vmem:[#allocation2 + $0x28] sm:$0x3] 0.0
        %1086 = vst [vmem:[#allocation2 + $0x30] sm:$0xff] 0.0
        %1087 = vst [vmem:[#allocation2 + $0x38] sm:$0xff] 0.0
        %1088 = vst [vmem:[#allocation2 + $0x40] sm:$0x3] 0.0
        %1089 = vst [vmem:[#allocation2 + $0x48] sm:$0xff] 0.0
        %1090 = vst [vmem:[#allocation2 + $0x50] sm:$0xff] 0.0
        %1091 = vst [vmem:[#allocation2 + $0x58] sm:$0x3] 0.0
        %1092 = vst [vmem:[#allocation2 + $0x60] sm:$0xff] 0.0
        %1093 = vst [vmem:[#allocation2 + $0x68] sm:$0xff] 0.0
        %1094 = vst [vmem:[#allocation2 + $0x70] sm:$0x3] 0.0
        %1095 = vst [vmem:[#allocation2 + $0x78] sm:$0xff] 0.0
        %1096 = vst [vmem:[#allocation2 + $0x80] sm:$0xff] 0.0
        %1097 = vst [vmem:[#allocation2 + $0x88] sm:$0x3] 0.0
        %1098 = vst [vmem:[#allocation2 + $0x90] sm:$0xff] 0.0
        %1099 = vst [vmem:[#allocation2 + $0x98] sm:$0xff] 0.0
        %1100 = vst [vmem:[#allocation2 + $0xa0] sm:$0x3] 0.0
        %1101 = vst [vmem:[#allocation2 + $0xa8] sm:$0xff] 0.0
        %1102 = vst [vmem:[#allocation2 + $0xb0] sm:$0xff] 0.0
        %1103 = vst [vmem:[#allocation2 + $0xb8] sm:$0x3] 0.0
        %1104 = vst [vmem:[#allocation2 + $0xc0] sm:$0xff] 0.0
        %1105 = vst [vmem:[#allocation2 + $0xc8] sm:$0xff] 0.0
        %1106 = vst [vmem:[#allocation2 + $0xd0] sm:$0x3] 0.0
        %1107 = vst [vmem:[#allocation2 + $0xd8] sm:$0xff] 0.0
        %1108 = vst [vmem:[#allocation2 + $0xe0] sm:$0xff] 0.0
        %1109 = vst [vmem:[#allocation2 + $0xe8] sm:$0x3] 0.0
        %1110 = vst [vmem:[#allocation2 + $0xf0] sm:$0xff] 0.0
        %1111 = vst [vmem:[#allocation2 + $0xf8] sm:$0xff] 0.0
        %1112 = vst [vmem:[#allocation2 + $0x100] sm:$0x3] 0.0
        %1113 = vst [vmem:[#allocation2 + $0x108] sm:$0xff] 0.0
        %1114 = vst [vmem:[#allocation2 + $0x110] sm:$0xff] 0.0
        %1115 = vst [vmem:[#allocation2 + $0x118] sm:$0x3] 0.0
        %1116 = vst [vmem:[#allocation2 + $0x120] sm:$0xff] 0.0
        %1117 = vst [vmem:[#allocation2 + $0x128] sm:$0xff] 0.0
        %1118 = vst [vmem:[#allocation2 + $0x130] sm:$0x3] 0.0
        %1119 = vst [vmem:[#allocation2 + $0x138] sm:$0xff] 0.0
        %1120 = vst [vmem:[#allocation2 + $0x140] sm:$0xff] 0.0
        %1121 = vst [vmem:[#allocation2 + $0x148] sm:$0x3] 0.0
        %1122 = vst [vmem:[#allocation2 + $0x150] sm:$0xff] 0.0
        %1123 = vst [vmem:[#allocation2 + $0x158] sm:$0xff] 0.0
        %1124 = vst [vmem:[#allocation2 + $0x160] sm:$0x3] 0.0
        %1125 = vst [vmem:[#allocation2 + $0x168] sm:$0xff] 0.0
        %1126 = vst [vmem:[#allocation2 + $0x170] sm:$0xff] 0.0
        %1127 = vst [vmem:[#allocation2 + $0x178] sm:$0x3] 0.0
        %1128 = vst [vmem:[#allocation2 + $0x180] sm:$0xff] 0.0
        %1129 = vst [vmem:[#allocation2 + $0x188] sm:$0xff] 0.0
        %1130 = vst [vmem:[#allocation2 + $0x190] sm:$0x3] 0.0
        %1131 = vst [vmem:[#allocation2 + $0x198] sm:$0xff] 0.0
        %1132 = vst [vmem:[#allocation2 + $0x1a0] sm:$0xff] 0.0
        %1133 = vst [vmem:[#allocation2 + $0x1a8] sm:$0x3] 0.0
        %s1134 = scalar_lea.vmem [#allocation2], 24
        %1135 = vst [vmem:[%s1134 + $0x1] sm:$0xff] %v700
        %1136 = vst [vmem:[%s1134 + $0x9] sm:$0xff] %v702
        %1137 = vst [vmem:[%s1134 + $0x19] sm:$0xff] %v705
        %1138 = vst [vmem:[%s1134 + $0x21] sm:$0xff] %v707
        %1139 = vst [vmem:[%s1134 + $0x31] sm:$0xff] %v710
        %1140 = vst [vmem:[%s1134 + $0x39] sm:$0xff] %v712
        %1141 = vst [vmem:[%s1134 + $0x49] sm:$0xff] %v715
        %1142 = vst [vmem:[%s1134 + $0x51] sm:$0xff] %v717
        %1143 = vst [vmem:[%s1134 + $0x61] sm:$0xff] %v720
        %1144 = vst [vmem:[%s1134 + $0x69] sm:$0xff] %v722
        %1145 = vst [vmem:[%s1134 + $0x79] sm:$0xff] %v725
        %1146 = vst [vmem:[%s1134 + $0x81] sm:$0xff] %v727
        %1147 = vst [vmem:[%s1134 + $0x91] sm:$0xff] %v730
        %1148 = vst [vmem:[%s1134 + $0x99] sm:$0xff] %v732
        %1149 = vst [vmem:[%s1134 + $0xa9] sm:$0xff] %v735
        %1150 = vst [vmem:[%s1134 + $0xb1] sm:$0xff] %v737
        %1151 = vst [vmem:[%s1134 + $0xc1] sm:$0xff] %v740
        %1152 = vst [vmem:[%s1134 + $0xc9] sm:$0xff] %v742
        %1153 = vst [vmem:[%s1134 + $0xd9] sm:$0xff] %v745
        %1154 = vst [vmem:[%s1134 + $0xe1] sm:$0xff] %v747
        %1155 = vst [vmem:[%s1134 + $0xf1] sm:$0xff] %v750
        %1156 = vst [vmem:[%s1134 + $0xf9] sm:$0xff] %v752
        %1157 = vst [vmem:[%s1134 + $0x109] sm:$0xff] %v755
        %1158 = vst [vmem:[%s1134 + $0x111] sm:$0xff] %v757
        %1159 = vst [vmem:[%s1134 + $0x121] sm:$0xff] %v760
        %1160 = vst [vmem:[%s1134 + $0x129] sm:$0xff] %v762
        %1161 = vst [vmem:[%s1134 + $0x139] sm:$0xff] %v765
        %1162 = vst [vmem:[%s1134 + $0x141] sm:$0xff] %v767
        %1163 = vst [vmem:[%s1134 + $0x151] sm:$0xff] %v770
        %1164 = vst [vmem:[%s1134 + $0x159] sm:$0xff] %v772
        %1165 = vst [vmem:[%s1134 + $0x169] sm:$0xff] %v775
        %1166 = vst [vmem:[%s1134 + $0x171] sm:$0xff] %v777
        %v1167 = vld [vmem:[#allocation2] sm:$0xff]
        %v1168 = vld [vmem:[#allocation2 + $0x8] sm:$0xff]
        %v1169 = vld [vmem:[#allocation2 + $0x18] sm:$0xff]
        %v1170 = vld [vmem:[#allocation2 + $0x20] sm:$0xff]
        %v1171 = vld [vmem:[#allocation2 + $0x30] sm:$0xff]
        %v1172 = vld [vmem:[#allocation2 + $0x38] sm:$0xff]
        %v1173 = vld [vmem:[#allocation2 + $0x48] sm:$0xff]
        %v1174 = vld [vmem:[#allocation2 + $0x50] sm:$0xff]
        %v1175 = vld [vmem:[#allocation2 + $0x60] sm:$0xff]
        %v1176 = vld [vmem:[#allocation2 + $0x68] sm:$0xff]
        %v1177 = vld [vmem:[#allocation2 + $0x78] sm:$0xff]
        %v1178 = vld [vmem:[#allocation2 + $0x80] sm:$0xff]
        %v1179 = vld [vmem:[#allocation2 + $0x90] sm:$0xff]
        %v1180 = vld [vmem:[#allocation2 + $0x98] sm:$0xff]
        %v1181 = vld [vmem:[#allocation2 + $0xa8] sm:$0xff]
        %v1182 = vld [vmem:[#allocation2 + $0xb0] sm:$0xff]
        %v1183 = vld [vmem:[#allocation2 + $0xc0] sm:$0xff]
        %v1184 = vld [vmem:[#allocation2 + $0xc8] sm:$0xff]
        %v1185 = vld [vmem:[#allocation2 + $0xd8] sm:$0xff]
        %v1186 = vld [vmem:[#allocation2 + $0xe0] sm:$0xff]
        %v1187 = vld [vmem:[#allocation2 + $0xf0] sm:$0xff]
        %v1188 = vld [vmem:[#allocation2 + $0xf8] sm:$0xff]
        %v1189 = vld [vmem:[#allocation2 + $0x108] sm:$0xff]
        %v1190 = vld [vmem:[#allocation2 + $0x110] sm:$0xff]
        %v1191 = vld [vmem:[#allocation2 + $0x120] sm:$0xff]
        %v1192 = vld [vmem:[#allocation2 + $0x128] sm:$0xff]
        %v1193 = vld [vmem:[#allocation2 + $0x138] sm:$0xff]
        %v1194 = vld [vmem:[#allocation2 + $0x140] sm:$0xff]
        %v1195 = vld [vmem:[#allocation2 + $0x150] sm:$0xff]
        %v1196 = vld [vmem:[#allocation2 + $0x158] sm:$0xff]
        %v1197 = vld [vmem:[#allocation2 + $0x168] sm:$0xff]
        %v1198 = vld [vmem:[#allocation2 + $0x170] sm:$0xff]
        %v1199 = vld [vmem:[%s5] sm:$0x1]
        %v1201 = vperm.slane %v1199, 0
        %v1203 = vmul.f32 %v1167, %v1201
        %v1204 = vmul.f32 %v1168, %v1201
        %v1205 = vmul.f32 %v1169, %v1201
        %v1206 = vmul.f32 %v1170, %v1201
        %v1207 = vmul.f32 %v1171, %v1201
        %v1208 = vmul.f32 %v1172, %v1201
        %v1209 = vmul.f32 %v1173, %v1201
        %v1210 = vmul.f32 %v1174, %v1201
        %v1211 = vmul.f32 %v1175, %v1201
        %v1212 = vmul.f32 %v1176, %v1201
        %v1213 = vmul.f32 %v1177, %v1201
        %v1214 = vmul.f32 %v1178, %v1201
        %v1215 = vmul.f32 %v1179, %v1201
        %v1216 = vmul.f32 %v1180, %v1201
        %v1217 = vmul.f32 %v1181, %v1201
        %v1218 = vmul.f32 %v1182, %v1201
        %v1219 = vmul.f32 %v1183, %v1201
        %v1220 = vmul.f32 %v1184, %v1201
        %v1221 = vmul.f32 %v1185, %v1201
        %v1222 = vmul.f32 %v1186, %v1201
        %v1223 = vmul.f32 %v1187, %v1201
        %v1224 = vmul.f32 %v1188, %v1201
        %v1225 = vmul.f32 %v1189, %v1201
        %v1226 = vmul.f32 %v1190, %v1201
        %v1227 = vmul.f32 %v1191, %v1201
        %v1228 = vmul.f32 %v1192, %v1201
        %v1229 = vmul.f32 %v1193, %v1201
        %v1230 = vmul.f32 %v1194, %v1201
        %v1231 = vmul.f32 %v1195, %v1201
        %v1232 = vmul.f32 %v1196, %v1201
        %v1233 = vmul.f32 %v1197, %v1201
        %v1234 = vmul.f32 %v1198, %v1201
        %v1235 = vadd.f32 %v1203, 0.0
        %v1236 = vadd.f32 %v1204, 0.0
        %v1237 = vadd.f32 %v1205, 0.0
        %v1238 = vadd.f32 %v1206, 0.0
        %v1239 = vadd.f32 %v1207, 0.0
        %v1240 = vadd.f32 %v1208, 0.0
        %v1241 = vadd.f32 %v1209, 0.0
        %v1242 = vadd.f32 %v1210, 0.0
        %v1243 = vadd.f32 %v1211, 0.0
        %v1244 = vadd.f32 %v1212, 0.0
        %v1245 = vadd.f32 %v1213, 0.0
        %v1246 = vadd.f32 %v1214, 0.0
        %v1247 = vadd.f32 %v1215, 0.0
        %v1248 = vadd.f32 %v1216, 0.0
        %v1249 = vadd.f32 %v1217, 0.0
        %v1250 = vadd.f32 %v1218, 0.0
        %v1251 = vadd.f32 %v1219, 0.0
        %v1252 = vadd.f32 %v1220, 0.0
        %v1253 = vadd.f32 %v1221, 0.0
        %v1254 = vadd.f32 %v1222, 0.0
        %v1255 = vadd.f32 %v1223, 0.0
        %v1256 = vadd.f32 %v1224, 0.0
        %v1257 = vadd.f32 %v1225, 0.0
        %v1258 = vadd.f32 %v1226, 0.0
        %v1259 = vadd.f32 %v1227, 0.0
        %v1260 = vadd.f32 %v1228, 0.0
        %v1261 = vadd.f32 %v1229, 0.0
        %v1262 = vadd.f32 %v1230, 0.0
        %v1263 = vadd.f32 %v1231, 0.0
        %v1264 = vadd.f32 %v1232, 0.0
        %v1265 = vadd.f32 %v1233, 0.0
        %v1266 = vadd.f32 %v1234, 0.0
        %v1267 = vld [vmem:[#allocation2 + $0x1] sm:$0xff]
        %v1268 = vld [vmem:[#allocation2 + $0x9] sm:$0xff]
        %v1269 = vld [vmem:[#allocation2 + $0x19] sm:$0xff]
        %v1270 = vld [vmem:[#allocation2 + $0x21] sm:$0xff]
        %v1271 = vld [vmem:[#allocation2 + $0x31] sm:$0xff]
        %v1272 = vld [vmem:[#allocation2 + $0x39] sm:$0xff]
        %v1273 = vld [vmem:[#allocation2 + $0x49] sm:$0xff]
        %v1274 = vld [vmem:[#allocation2 + $0x51] sm:$0xff]
        %v1275 = vld [vmem:[#allocation2 + $0x61] sm:$0xff]
        %v1276 = vld [vmem:[#allocation2 + $0x69] sm:$0xff]
        %v1277 = vld [vmem:[#allocation2 + $0x79] sm:$0xff]
        %v1278 = vld [vmem:[#allocation2 + $0x81] sm:$0xff]
        %v1279 = vld [vmem:[#allocation2 + $0x91] sm:$0xff]
        %v1280 = vld [vmem:[#allocation2 + $0x99] sm:$0xff]
        %v1281 = vld [vmem:[#allocation2 + $0xa9] sm:$0xff]
        %v1282 = vld [vmem:[#allocation2 + $0xb1] sm:$0xff]
        %v1283 = vld [vmem:[#allocation2 + $0xc1] sm:$0xff]
        %v1284 = vld [vmem:[#allocation2 + $0xc9] sm:$0xff]
        %v1285 = vld [vmem:[#allocation2 + $0xd9] sm:$0xff]
        %v1286 = vld [vmem:[#allocation2 + $0xe1] sm:$0xff]
        %v1287 = vld [vmem:[#allocation2 + $0xf1] sm:$0xff]
        %v1288 = vld [vmem:[#allocation2 + $0xf9] sm:$0xff]
        %v1289 = vld [vmem:[#allocation2 + $0x109] sm:$0xff]
        %v1290 = vld [vmem:[#allocation2 + $0x111] sm:$0xff]
        %v1291 = vld [vmem:[#allocation2 + $0x121] sm:$0xff]
        %v1292 = vld [vmem:[#allocation2 + $0x129] sm:$0xff]
        %v1293 = vld [vmem:[#allocation2 + $0x139] sm:$0xff]
        %v1294 = vld [vmem:[#allocation2 + $0x141] sm:$0xff]
        %v1295 = vld [vmem:[#allocation2 + $0x151] sm:$0xff]
        %v1296 = vld [vmem:[#allocation2 + $0x159] sm:$0xff]
        %v1297 = vld [vmem:[#allocation2 + $0x169] sm:$0xff]
        %v1298 = vld [vmem:[#allocation2 + $0x171] sm:$0xff]
        %s1299 = scalar_lea.vmem %s5, 1
        %v1300 = vld [vmem:[%s1299] sm:$0x1]
        %v1302 = vperm.slane %v1300, 0
        %v1304 = vmul.f32 %v1267, %v1302
        %v1305 = vmul.f32 %v1268, %v1302
        %v1306 = vmul.f32 %v1269, %v1302
        %v1307 = vmul.f32 %v1270, %v1302
        %v1308 = vmul.f32 %v1271, %v1302
        %v1309 = vmul.f32 %v1272, %v1302
        %v1310 = vmul.f32 %v1273, %v1302
        %v1311 = vmul.f32 %v1274, %v1302
        %v1312 = vmul.f32 %v1275, %v1302
        %v1313 = vmul.f32 %v1276, %v1302
        %v1314 = vmul.f32 %v1277, %v1302
        %v1315 = vmul.f32 %v1278, %v1302
        %v1316 = vmul.f32 %v1279, %v1302
        %v1317 = vmul.f32 %v1280, %v1302
        %v1318 = vmul.f32 %v1281, %v1302
        %v1319 = vmul.f32 %v1282, %v1302
        %v1320 = vmul.f32 %v1283, %v1302
        %v1321 = vmul.f32 %v1284, %v1302
        %v1322 = vmul.f32 %v1285, %v1302
        %v1323 = vmul.f32 %v1286, %v1302
        %v1324 = vmul.f32 %v1287, %v1302
        %v1325 = vmul.f32 %v1288, %v1302
        %v1326 = vmul.f32 %v1289, %v1302
        %v1327 = vmul.f32 %v1290, %v1302
        %v1328 = vmul.f32 %v1291, %v1302
        %v1329 = vmul.f32 %v1292, %v1302
        %v1330 = vmul.f32 %v1293, %v1302
        %v1331 = vmul.f32 %v1294, %v1302
        %v1332 = vmul.f32 %v1295, %v1302
        %v1333 = vmul.f32 %v1296, %v1302
        %v1334 = vmul.f32 %v1297, %v1302
        %v1335 = vmul.f32 %v1298, %v1302
        %v1336 = vadd.f32 %v1235, %v1304
        %v1337 = vadd.f32 %v1236, %v1305
        %v1338 = vadd.f32 %v1237, %v1306
        %v1339 = vadd.f32 %v1238, %v1307
        %v1340 = vadd.f32 %v1239, %v1308
        %v1341 = vadd.f32 %v1240, %v1309
        %v1342 = vadd.f32 %v1241, %v1310
        %v1343 = vadd.f32 %v1242, %v1311
        %v1344 = vadd.f32 %v1243, %v1312
        %v1345 = vadd.f32 %v1244, %v1313
        %v1346 = vadd.f32 %v1245, %v1314
        %v1347 = vadd.f32 %v1246, %v1315
        %v1348 = vadd.f32 %v1247, %v1316
        %v1349 = vadd.f32 %v1248, %v1317
        %v1350 = vadd.f32 %v1249, %v1318
        %v1351 = vadd.f32 %v1250, %v1319
        %v1352 = vadd.f32 %v1251, %v1320
        %v1353 = vadd.f32 %v1252, %v1321
        %v1354 = vadd.f32 %v1253, %v1322
        %v1355 = vadd.f32 %v1254, %v1323
        %v1356 = vadd.f32 %v1255, %v1324
        %v1357 = vadd.f32 %v1256, %v1325
        %v1358 = vadd.f32 %v1257, %v1326
        %v1359 = vadd.f32 %v1258, %v1327
        %v1360 = vadd.f32 %v1259, %v1328
        %v1361 = vadd.f32 %v1260, %v1329
        %v1362 = vadd.f32 %v1261, %v1330
        %v1363 = vadd.f32 %v1262, %v1331
        %v1364 = vadd.f32 %v1263, %v1332
        %v1365 = vadd.f32 %v1264, %v1333
        %v1366 = vadd.f32 %v1265, %v1334
        %v1367 = vadd.f32 %v1266, %v1335
        %v1368 = vld [vmem:[#allocation2 + $0x2] sm:$0xff]
        %v1369 = vld [vmem:[#allocation2 + $0xa] sm:$0xff]
        %v1370 = vld [vmem:[#allocation2 + $0x1a] sm:$0xff]
        %v1371 = vld [vmem:[#allocation2 + $0x22] sm:$0xff]
        %v1372 = vld [vmem:[#allocation2 + $0x32] sm:$0xff]
        %v1373 = vld [vmem:[#allocation2 + $0x3a] sm:$0xff]
        %v1374 = vld [vmem:[#allocation2 + $0x4a] sm:$0xff]
        %v1375 = vld [vmem:[#allocation2 + $0x52] sm:$0xff]
        %v1376 = vld [vmem:[#allocation2 + $0x62] sm:$0xff]
        %v1377 = vld [vmem:[#allocation2 + $0x6a] sm:$0xff]
        %v1378 = vld [vmem:[#allocation2 + $0x7a] sm:$0xff]
        %v1379 = vld [vmem:[#allocation2 + $0x82] sm:$0xff]
        %v1380 = vld [vmem:[#allocation2 + $0x92] sm:$0xff]
        %v1381 = vld [vmem:[#allocation2 + $0x9a] sm:$0xff]
        %v1382 = vld [vmem:[#allocation2 + $0xaa] sm:$0xff]
        %v1383 = vld [vmem:[#allocation2 + $0xb2] sm:$0xff]
        %v1384 = vld [vmem:[#allocation2 + $0xc2] sm:$0xff]
        %v1385 = vld [vmem:[#allocation2 + $0xca] sm:$0xff]
        %v1386 = vld [vmem:[#allocation2 + $0xda] sm:$0xff]
        %v1387 = vld [vmem:[#allocation2 + $0xe2] sm:$0xff]
        %v1388 = vld [vmem:[#allocation2 + $0xf2] sm:$0xff]
        %v1389 = vld [vmem:[#allocation2 + $0xfa] sm:$0xff]
        %v1390 = vld [vmem:[#allocation2 + $0x10a] sm:$0xff]
        %v1391 = vld [vmem:[#allocation2 + $0x112] sm:$0xff]
        %v1392 = vld [vmem:[#allocation2 + $0x122] sm:$0xff]
        %v1393 = vld [vmem:[#allocation2 + $0x12a] sm:$0xff]
        %v1394 = vld [vmem:[#allocation2 + $0x13a] sm:$0xff]
        %v1395 = vld [vmem:[#allocation2 + $0x142] sm:$0xff]
        %v1396 = vld [vmem:[#allocation2 + $0x152] sm:$0xff]
        %v1397 = vld [vmem:[#allocation2 + $0x15a] sm:$0xff]
        %v1398 = vld [vmem:[#allocation2 + $0x16a] sm:$0xff]
        %v1399 = vld [vmem:[#allocation2 + $0x172] sm:$0xff]
        %s1400 = scalar_lea.vmem %s5, 2
        %v1401 = vld [vmem:[%s1400] sm:$0x1]
        %v1403 = vperm.slane %v1401, 0
        %v1405 = vmul.f32 %v1368, %v1403
        %v1406 = vmul.f32 %v1369, %v1403
        %v1407 = vmul.f32 %v1370, %v1403
        %v1408 = vmul.f32 %v1371, %v1403
        %v1409 = vmul.f32 %v1372, %v1403
        %v1410 = vmul.f32 %v1373, %v1403
        %v1411 = vmul.f32 %v1374, %v1403
        %v1412 = vmul.f32 %v1375, %v1403
        %v1413 = vmul.f32 %v1376, %v1403
        %v1414 = vmul.f32 %v1377, %v1403
        %v1415 = vmul.f32 %v1378, %v1403
        %v1416 = vmul.f32 %v1379, %v1403
        %v1417 = vmul.f32 %v1380, %v1403
        %v1418 = vmul.f32 %v1381, %v1403
        %v1419 = vmul.f32 %v1382, %v1403
        %v1420 = vmul.f32 %v1383, %v1403
        %v1421 = vmul.f32 %v1384, %v1403
        %v1422 = vmul.f32 %v1385, %v1403
        %v1423 = vmul.f32 %v1386, %v1403
        %v1424 = vmul.f32 %v1387, %v1403
        %v1425 = vmul.f32 %v1388, %v1403
        %v1426 = vmul.f32 %v1389, %v1403
        %v1427 = vmul.f32 %v1390, %v1403
        %v1428 = vmul.f32 %v1391, %v1403
        %v1429 = vmul.f32 %v1392, %v1403
        %v1430 = vmul.f32 %v1393, %v1403
        %v1431 = vmul.f32 %v1394, %v1403
        %v1432 = vmul.f32 %v1395, %v1403
        %v1433 = vmul.f32 %v1396, %v1403
        %v1434 = vmul.f32 %v1397, %v1403
        %v1435 = vmul.f32 %v1398, %v1403
        %v1436 = vmul.f32 %v1399, %v1403
        %v1437 = vadd.f32 %v1336, %v1405
        %v1438 = vadd.f32 %v1337, %v1406
        %v1439 = vadd.f32 %v1338, %v1407
        %v1440 = vadd.f32 %v1339, %v1408
        %v1441 = vadd.f32 %v1340, %v1409
        %v1442 = vadd.f32 %v1341, %v1410
        %v1443 = vadd.f32 %v1342, %v1411
        %v1444 = vadd.f32 %v1343, %v1412
        %v1445 = vadd.f32 %v1344, %v1413
        %v1446 = vadd.f32 %v1345, %v1414
        %v1447 = vadd.f32 %v1346, %v1415
        %v1448 = vadd.f32 %v1347, %v1416
        %v1449 = vadd.f32 %v1348, %v1417
        %v1450 = vadd.f32 %v1349, %v1418
        %v1451 = vadd.f32 %v1350, %v1419
        %v1452 = vadd.f32 %v1351, %v1420
        %v1453 = vadd.f32 %v1352, %v1421
        %v1454 = vadd.f32 %v1353, %v1422
        %v1455 = vadd.f32 %v1354, %v1423
        %v1456 = vadd.f32 %v1355, %v1424
        %v1457 = vadd.f32 %v1356, %v1425
        %v1458 = vadd.f32 %v1357, %v1426
        %v1459 = vadd.f32 %v1358, %v1427
        %v1460 = vadd.f32 %v1359, %v1428
        %v1461 = vadd.f32 %v1360, %v1429
        %v1462 = vadd.f32 %v1361, %v1430
        %v1463 = vadd.f32 %v1362, %v1431
        %v1464 = vadd.f32 %v1363, %v1432
        %v1465 = vadd.f32 %v1364, %v1433
        %v1466 = vadd.f32 %v1365, %v1434
        %v1467 = vadd.f32 %v1366, %v1435
        %v1468 = vadd.f32 %v1367, %v1436
        %v1469 = vld [vmem:[%s1134] sm:$0xff]
        %v1470 = vld [vmem:[%s1134 + $0x8] sm:$0xff]
        %v1471 = vld [vmem:[%s1134 + $0x18] sm:$0xff]
        %v1472 = vld [vmem:[%s1134 + $0x20] sm:$0xff]
        %v1473 = vld [vmem:[%s1134 + $0x30] sm:$0xff]
        %v1474 = vld [vmem:[%s1134 + $0x38] sm:$0xff]
        %v1475 = vld [vmem:[%s1134 + $0x48] sm:$0xff]
        %v1476 = vld [vmem:[%s1134 + $0x50] sm:$0xff]
        %v1477 = vld [vmem:[%s1134 + $0x60] sm:$0xff]
        %v1478 = vld [vmem:[%s1134 + $0x68] sm:$0xff]
        %v1479 = vld [vmem:[%s1134 + $0x78] sm:$0xff]
        %v1480 = vld [vmem:[%s1134 + $0x80] sm:$0xff]
        %v1481 = vld [vmem:[%s1134 + $0x90] sm:$0xff]
        %v1482 = vld [vmem:[%s1134 + $0x98] sm:$0xff]
        %v1483 = vld [vmem:[%s1134 + $0xa8] sm:$0xff]
        %v1484 = vld [vmem:[%s1134 + $0xb0] sm:$0xff]
        %v1485 = vld [vmem:[%s1134 + $0xc0] sm:$0xff]
        %v1486 = vld [vmem:[%s1134 + $0xc8] sm:$0xff]
        %v1487 = vld [vmem:[%s1134 + $0xd8] sm:$0xff]
        %v1488 = vld [vmem:[%s1134 + $0xe0] sm:$0xff]
        %v1489 = vld [vmem:[%s1134 + $0xf0] sm:$0xff]
        %v1490 = vld [vmem:[%s1134 + $0xf8] sm:$0xff]
        %v1491 = vld [vmem:[%s1134 + $0x108] sm:$0xff]
        %v1492 = vld [vmem:[%s1134 + $0x110] sm:$0xff]
        %v1493 = vld [vmem:[%s1134 + $0x120] sm:$0xff]
        %v1494 = vld [vmem:[%s1134 + $0x128] sm:$0xff]
        %v1495 = vld [vmem:[%s1134 + $0x138] sm:$0xff]
        %v1496 = vld [vmem:[%s1134 + $0x140] sm:$0xff]
        %v1497 = vld [vmem:[%s1134 + $0x150] sm:$0xff]
        %v1498 = vld [vmem:[%s1134 + $0x158] sm:$0xff]
        %v1499 = vld [vmem:[%s1134 + $0x168] sm:$0xff]
        %v1500 = vld [vmem:[%s1134 + $0x170] sm:$0xff]
        %s1501 = scalar_lea.vmem %s5, 3
        %v1502 = vld [vmem:[%s1501] sm:$0x1]
        %v1504 = vperm.slane %v1502, 0
        %v1506 = vmul.f32 %v1469, %v1504
        %v1507 = vmul.f32 %v1470, %v1504
        %v1508 = vmul.f32 %v1471, %v1504
        %v1509 = vmul.f32 %v1472, %v1504
        %v1510 = vmul.f32 %v1473, %v1504
        %v1511 = vmul.f32 %v1474, %v1504
        %v1512 = vmul.f32 %v1475, %v1504
        %v1513 = vmul.f32 %v1476, %v1504
        %v1514 = vmul.f32 %v1477, %v1504
        %v1515 = vmul.f32 %v1478, %v1504
        %v1516 = vmul.f32 %v1479, %v1504
        %v1517 = vmul.f32 %v1480, %v1504
        %v1518 = vmul.f32 %v1481, %v1504
        %v1519 = vmul.f32 %v1482, %v1504
        %v1520 = vmul.f32 %v1483, %v1504
        %v1521 = vmul.f32 %v1484, %v1504
        %v1522 = vmul.f32 %v1485, %v1504
        %v1523 = vmul.f32 %v1486, %v1504
        %v1524 = vmul.f32 %v1487, %v1504
        %v1525 = vmul.f32 %v1488, %v1504
        %v1526 = vmul.f32 %v1489, %v1504
        %v1527 = vmul.f32 %v1490, %v1504
        %v1528 = vmul.f32 %v1491, %v1504
        %v1529 = vmul.f32 %v1492, %v1504
        %v1530 = vmul.f32 %v1493, %v1504
        %v1531 = vmul.f32 %v1494, %v1504
        %v1532 = vmul.f32 %v1495, %v1504
        %v1533 = vmul.f32 %v1496, %v1504
        %v1534 = vmul.f32 %v1497, %v1504
        %v1535 = vmul.f32 %v1498, %v1504
        %v1536 = vmul.f32 %v1499, %v1504
        %v1537 = vmul.f32 %v1500, %v1504
        %v1538 = vadd.f32 %v1437, %v1506
        %v1539 = vadd.f32 %v1438, %v1507
        %v1540 = vadd.f32 %v1439, %v1508
        %v1541 = vadd.f32 %v1440, %v1509
        %v1542 = vadd.f32 %v1441, %v1510
        %v1543 = vadd.f32 %v1442, %v1511
        %v1544 = vadd.f32 %v1443, %v1512
        %v1545 = vadd.f32 %v1444, %v1513
        %v1546 = vadd.f32 %v1445, %v1514
        %v1547 = vadd.f32 %v1446, %v1515
        %v1548 = vadd.f32 %v1447, %v1516
        %v1549 = vadd.f32 %v1448, %v1517
        %v1550 = vadd.f32 %v1449, %v1518
        %v1551 = vadd.f32 %v1450, %v1519
        %v1552 = vadd.f32 %v1451, %v1520
        %v1553 = vadd.f32 %v1452, %v1521
        %v1554 = vadd.f32 %v1453, %v1522
        %v1555 = vadd.f32 %v1454, %v1523
        %v1556 = vadd.f32 %v1455, %v1524
        %v1557 = vadd.f32 %v1456, %v1525
        %v1558 = vadd.f32 %v1457, %v1526
        %v1559 = vadd.f32 %v1458, %v1527
        %v1560 = vadd.f32 %v1459, %v1528
        %v1561 = vadd.f32 %v1460, %v1529
        %v1562 = vadd.f32 %v1461, %v1530
        %v1563 = vadd.f32 %v1462, %v1531
        %v1564 = vadd.f32 %v1463, %v1532
        %v1565 = vadd.f32 %v1464, %v1533
        %v1566 = vadd.f32 %v1465, %v1534
        %v1567 = vadd.f32 %v1466, %v1535
        %v1568 = vadd.f32 %v1467, %v1536
        %v1569 = vadd.f32 %v1468, %v1537
        %v1570 = vld [vmem:[%s1134 + $0x1] sm:$0xff]
        %v1571 = vld [vmem:[%s1134 + $0x9] sm:$0xff]
        %v1572 = vld [vmem:[%s1134 + $0x19] sm:$0xff]
        %v1573 = vld [vmem:[%s1134 + $0x21] sm:$0xff]
        %v1574 = vld [vmem:[%s1134 + $0x31] sm:$0xff]
        %v1575 = vld [vmem:[%s1134 + $0x39] sm:$0xff]
        %v1576 = vld [vmem:[%s1134 + $0x49] sm:$0xff]
        %v1577 = vld [vmem:[%s1134 + $0x51] sm:$0xff]
        %v1578 = vld [vmem:[%s1134 + $0x61] sm:$0xff]
        %v1579 = vld [vmem:[%s1134 + $0x69] sm:$0xff]
        %v1580 = vld [vmem:[%s1134 + $0x79] sm:$0xff]
        %v1581 = vld [vmem:[%s1134 + $0x81] sm:$0xff]
        %v1582 = vld [vmem:[%s1134 + $0x91] sm:$0xff]
        %v1583 = vld [vmem:[%s1134 + $0x99] sm:$0xff]
        %v1584 = vld [vmem:[%s1134 + $0xa9] sm:$0xff]
        %v1585 = vld [vmem:[%s1134 + $0xb1] sm:$0xff]
        %v1586 = vld [vmem:[%s1134 + $0xc1] sm:$0xff]
        %v1587 = vld [vmem:[%s1134 + $0xc9] sm:$0xff]
        %v1588 = vld [vmem:[%s1134 + $0xd9] sm:$0xff]
        %v1589 = vld [vmem:[%s1134 + $0xe1] sm:$0xff]
        %v1590 = vld [vmem:[%s1134 + $0xf1] sm:$0xff]
        %v1591 = vld [vmem:[%s1134 + $0xf9] sm:$0xff]
        %v1592 = vld [vmem:[%s1134 + $0x109] sm:$0xff]
        %v1593 = vld [vmem:[%s1134 + $0x111] sm:$0xff]
        %v1594 = vld [vmem:[%s1134 + $0x121] sm:$0xff]
        %v1595 = vld [vmem:[%s1134 + $0x129] sm:$0xff]
        %v1596 = vld [vmem:[%s1134 + $0x139] sm:$0xff]
        %v1597 = vld [vmem:[%s1134 + $0x141] sm:$0xff]
        %v1598 = vld [vmem:[%s1134 + $0x151] sm:$0xff]
        %v1599 = vld [vmem:[%s1134 + $0x159] sm:$0xff]
        %v1600 = vld [vmem:[%s1134 + $0x169] sm:$0xff]
        %v1601 = vld [vmem:[%s1134 + $0x171] sm:$0xff]
        %s1602 = scalar_lea.vmem %s5, 4
        %v1603 = vld [vmem:[%s1602] sm:$0x1]
        %v1605 = vperm.slane %v1603, 0
        %v1607 = vmul.f32 %v1570, %v1605
        %v1608 = vmul.f32 %v1571, %v1605
        %v1609 = vmul.f32 %v1572, %v1605
        %v1610 = vmul.f32 %v1573, %v1605
        %v1611 = vmul.f32 %v1574, %v1605
        %v1612 = vmul.f32 %v1575, %v1605
        %v1613 = vmul.f32 %v1576, %v1605
        %v1614 = vmul.f32 %v1577, %v1605
        %v1615 = vmul.f32 %v1578, %v1605
        %v1616 = vmul.f32 %v1579, %v1605
        %v1617 = vmul.f32 %v1580, %v1605
        %v1618 = vmul.f32 %v1581, %v1605
        %v1619 = vmul.f32 %v1582, %v1605
        %v1620 = vmul.f32 %v1583, %v1605
        %v1621 = vmul.f32 %v1584, %v1605
        %v1622 = vmul.f32 %v1585, %v1605
        %v1623 = vmul.f32 %v1586, %v1605
        %v1624 = vmul.f32 %v1587, %v1605
        %v1625 = vmul.f32 %v1588, %v1605
        %v1626 = vmul.f32 %v1589, %v1605
        %v1627 = vmul.f32 %v1590, %v1605
        %v1628 = vmul.f32 %v1591, %v1605
        %v1629 = vmul.f32 %v1592, %v1605
        %v1630 = vmul.f32 %v1593, %v1605
        %v1631 = vmul.f32 %v1594, %v1605
        %v1632 = vmul.f32 %v1595, %v1605
        %v1633 = vmul.f32 %v1596, %v1605
        %v1634 = vmul.f32 %v1597, %v1605
        %v1635 = vmul.f32 %v1598, %v1605
        %v1636 = vmul.f32 %v1599, %v1605
        %v1637 = vmul.f32 %v1600, %v1605
        %v1638 = vmul.f32 %v1601, %v1605
        %v1639 = vadd.f32 %v1538, %v1607
        %v1640 = vadd.f32 %v1539, %v1608
        %v1641 = vadd.f32 %v1540, %v1609
        %v1642 = vadd.f32 %v1541, %v1610
        %v1643 = vadd.f32 %v1542, %v1611
        %v1644 = vadd.f32 %v1543, %v1612
        %v1645 = vadd.f32 %v1544, %v1613
        %v1646 = vadd.f32 %v1545, %v1614
        %v1647 = vadd.f32 %v1546, %v1615
        %v1648 = vadd.f32 %v1547, %v1616
        %v1649 = vadd.f32 %v1548, %v1617
        %v1650 = vadd.f32 %v1549, %v1618
        %v1651 = vadd.f32 %v1550, %v1619
        %v1652 = vadd.f32 %v1551, %v1620
        %v1653 = vadd.f32 %v1552, %v1621
        %v1654 = vadd.f32 %v1553, %v1622
        %v1655 = vadd.f32 %v1554, %v1623
        %v1656 = vadd.f32 %v1555, %v1624
        %v1657 = vadd.f32 %v1556, %v1625
        %v1658 = vadd.f32 %v1557, %v1626
        %v1659 = vadd.f32 %v1558, %v1627
        %v1660 = vadd.f32 %v1559, %v1628
        %v1661 = vadd.f32 %v1560, %v1629
        %v1662 = vadd.f32 %v1561, %v1630
        %v1663 = vadd.f32 %v1562, %v1631
        %v1664 = vadd.f32 %v1563, %v1632
        %v1665 = vadd.f32 %v1564, %v1633
        %v1666 = vadd.f32 %v1565, %v1634
        %v1667 = vadd.f32 %v1566, %v1635
        %v1668 = vadd.f32 %v1567, %v1636
        %v1669 = vadd.f32 %v1568, %v1637
        %v1670 = vadd.f32 %v1569, %v1638
        %v1671 = vld [vmem:[%s1134 + $0x2] sm:$0xff]
        %v1672 = vld [vmem:[%s1134 + $0xa] sm:$0xff]
        %v1673 = vld [vmem:[%s1134 + $0x1a] sm:$0xff]
        %v1674 = vld [vmem:[%s1134 + $0x22] sm:$0xff]
        %v1675 = vld [vmem:[%s1134 + $0x32] sm:$0xff]
        %v1676 = vld [vmem:[%s1134 + $0x3a] sm:$0xff]
        %v1677 = vld [vmem:[%s1134 + $0x4a] sm:$0xff]
        %v1678 = vld [vmem:[%s1134 + $0x52] sm:$0xff]
        %v1679 = vld [vmem:[%s1134 + $0x62] sm:$0xff]
        %v1680 = vld [vmem:[%s1134 + $0x6a] sm:$0xff]
        %v1681 = vld [vmem:[%s1134 + $0x7a] sm:$0xff]
        %v1682 = vld [vmem:[%s1134 + $0x82] sm:$0xff]
        %v1683 = vld [vmem:[%s1134 + $0x92] sm:$0xff]
        %v1684 = vld [vmem:[%s1134 + $0x9a] sm:$0xff]
        %v1685 = vld [vmem:[%s1134 + $0xaa] sm:$0xff]
        %v1686 = vld [vmem:[%s1134 + $0xb2] sm:$0xff]
        %v1687 = vld [vmem:[%s1134 + $0xc2] sm:$0xff]
        %v1688 = vld [vmem:[%s1134 + $0xca] sm:$0xff]
        %v1689 = vld [vmem:[%s1134 + $0xda] sm:$0xff]
        %v1690 = vld [vmem:[%s1134 + $0xe2] sm:$0xff]
        %v1691 = vld [vmem:[%s1134 + $0xf2] sm:$0xff]
        %v1692 = vld [vmem:[%s1134 + $0xfa] sm:$0xff]
        %v1693 = vld [vmem:[%s1134 + $0x10a] sm:$0xff]
        %v1694 = vld [vmem:[%s1134 + $0x112] sm:$0xff]
        %v1695 = vld [vmem:[%s1134 + $0x122] sm:$0xff]
        %v1696 = vld [vmem:[%s1134 + $0x12a] sm:$0xff]
        %v1697 = vld [vmem:[%s1134 + $0x13a] sm:$0xff]
        %v1698 = vld [vmem:[%s1134 + $0x142] sm:$0xff]
        %v1699 = vld [vmem:[%s1134 + $0x152] sm:$0xff]
        %v1700 = vld [vmem:[%s1134 + $0x15a] sm:$0xff]
        %v1701 = vld [vmem:[%s1134 + $0x16a] sm:$0xff]
        %v1702 = vld [vmem:[%s1134 + $0x172] sm:$0xff]
        %s1703 = scalar_lea.vmem %s5, 5
        %v1704 = vld [vmem:[%s1703] sm:$0x1]
        %v1706 = vperm.slane %v1704, 0
        %v1708 = vmul.f32 %v1671, %v1706
        %v1709 = vmul.f32 %v1672, %v1706
        %v1710 = vmul.f32 %v1673, %v1706
        %v1711 = vmul.f32 %v1674, %v1706
        %v1712 = vmul.f32 %v1675, %v1706
        %v1713 = vmul.f32 %v1676, %v1706
        %v1714 = vmul.f32 %v1677, %v1706
        %v1715 = vmul.f32 %v1678, %v1706
        %v1716 = vmul.f32 %v1679, %v1706
        %v1717 = vmul.f32 %v1680, %v1706
        %v1718 = vmul.f32 %v1681, %v1706
        %v1719 = vmul.f32 %v1682, %v1706
        %v1720 = vmul.f32 %v1683, %v1706
        %v1721 = vmul.f32 %v1684, %v1706
        %v1722 = vmul.f32 %v1685, %v1706
        %v1723 = vmul.f32 %v1686, %v1706
        %v1724 = vmul.f32 %v1687, %v1706
        %v1725 = vmul.f32 %v1688, %v1706
        %v1726 = vmul.f32 %v1689, %v1706
        %v1727 = vmul.f32 %v1690, %v1706
        %v1728 = vmul.f32 %v1691, %v1706
        %v1729 = vmul.f32 %v1692, %v1706
        %v1730 = vmul.f32 %v1693, %v1706
        %v1731 = vmul.f32 %v1694, %v1706
        %v1732 = vmul.f32 %v1695, %v1706
        %v1733 = vmul.f32 %v1696, %v1706
        %v1734 = vmul.f32 %v1697, %v1706
        %v1735 = vmul.f32 %v1698, %v1706
        %v1736 = vmul.f32 %v1699, %v1706
        %v1737 = vmul.f32 %v1700, %v1706
        %v1738 = vmul.f32 %v1701, %v1706
        %v1739 = vmul.f32 %v1702, %v1706
        %v1740 = vadd.f32 %v1639, %v1708
        %v1741 = vadd.f32 %v1640, %v1709
        %v1742 = vadd.f32 %v1641, %v1710
        %v1743 = vadd.f32 %v1642, %v1711
        %v1744 = vadd.f32 %v1643, %v1712
        %v1745 = vadd.f32 %v1644, %v1713
        %v1746 = vadd.f32 %v1645, %v1714
        %v1747 = vadd.f32 %v1646, %v1715
        %v1748 = vadd.f32 %v1647, %v1716
        %v1749 = vadd.f32 %v1648, %v1717
        %v1750 = vadd.f32 %v1649, %v1718
        %v1751 = vadd.f32 %v1650, %v1719
        %v1752 = vadd.f32 %v1651, %v1720
        %v1753 = vadd.f32 %v1652, %v1721
        %v1754 = vadd.f32 %v1653, %v1722
        %v1755 = vadd.f32 %v1654, %v1723
        %v1756 = vadd.f32 %v1655, %v1724
        %v1757 = vadd.f32 %v1656, %v1725
        %v1758 = vadd.f32 %v1657, %v1726
        %v1759 = vadd.f32 %v1658, %v1727
        %v1760 = vadd.f32 %v1659, %v1728
        %v1761 = vadd.f32 %v1660, %v1729
        %v1762 = vadd.f32 %v1661, %v1730
        %v1763 = vadd.f32 %v1662, %v1731
        %v1764 = vadd.f32 %v1663, %v1732
        %v1765 = vadd.f32 %v1664, %v1733
        %v1766 = vadd.f32 %v1665, %v1734
        %v1767 = vadd.f32 %v1666, %v1735
        %v1768 = vadd.f32 %v1667, %v1736
        %v1769 = vadd.f32 %v1668, %v1737
        %v1770 = vadd.f32 %v1669, %v1738
        %v1771 = vadd.f32 %v1670, %v1739
        %s1772 = scalar_lea.vmem [#allocation2], 48
        %v1773 = vld [vmem:[%s1772] sm:$0xff]
        %v1774 = vld [vmem:[%s1772 + $0x8] sm:$0xff]
        %v1775 = vld [vmem:[%s1772 + $0x18] sm:$0xff]
        %v1776 = vld [vmem:[%s1772 + $0x20] sm:$0xff]
        %v1777 = vld [vmem:[%s1772 + $0x30] sm:$0xff]
        %v1778 = vld [vmem:[%s1772 + $0x38] sm:$0xff]
        %v1779 = vld [vmem:[%s1772 + $0x48] sm:$0xff]
        %v1780 = vld [vmem:[%s1772 + $0x50] sm:$0xff]
        %v1781 = vld [vmem:[%s1772 + $0x60] sm:$0xff]
        %v1782 = vld [vmem:[%s1772 + $0x68] sm:$0xff]
        %v1783 = vld [vmem:[%s1772 + $0x78] sm:$0xff]
        %v1784 = vld [vmem:[%s1772 + $0x80] sm:$0xff]
        %v1785 = vld [vmem:[%s1772 + $0x90] sm:$0xff]
        %v1786 = vld [vmem:[%s1772 + $0x98] sm:$0xff]
        %v1787 = vld [vmem:[%s1772 + $0xa8] sm:$0xff]
        %v1788 = vld [vmem:[%s1772 + $0xb0] sm:$0xff]
        %v1789 = vld [vmem:[%s1772 + $0xc0] sm:$0xff]
        %v1790 = vld [vmem:[%s1772 + $0xc8] sm:$0xff]
        %v1791 = vld [vmem:[%s1772 + $0xd8] sm:$0xff]
        %v1792 = vld [vmem:[%s1772 + $0xe0] sm:$0xff]
        %v1793 = vld [vmem:[%s1772 + $0xf0] sm:$0xff]
        %v1794 = vld [vmem:[%s1772 + $0xf8] sm:$0xff]
        %v1795 = vld [vmem:[%s1772 + $0x108] sm:$0xff]
        %v1796 = vld [vmem:[%s1772 + $0x110] sm:$0xff]
        %v1797 = vld [vmem:[%s1772 + $0x120] sm:$0xff]
        %v1798 = vld [vmem:[%s1772 + $0x128] sm:$0xff]
        %v1799 = vld [vmem:[%s1772 + $0x138] sm:$0xff]
        %v1800 = vld [vmem:[%s1772 + $0x140] sm:$0xff]
        %v1801 = vld [vmem:[%s1772 + $0x150] sm:$0xff]
        %v1802 = vld [vmem:[%s1772 + $0x158] sm:$0xff]
        %v1803 = vld [vmem:[%s1772 + $0x168] sm:$0xff]
        %v1804 = vld [vmem:[%s1772 + $0x170] sm:$0xff]
        %s1805 = scalar_lea.vmem %s5, 6
        %v1806 = vld [vmem:[%s1805] sm:$0x1]
        %v1808 = vperm.slane %v1806, 0
        %v1810 = vmul.f32 %v1773, %v1808
        %v1811 = vmul.f32 %v1774, %v1808
        %v1812 = vmul.f32 %v1775, %v1808
        %v1813 = vmul.f32 %v1776, %v1808
        %v1814 = vmul.f32 %v1777, %v1808
        %v1815 = vmul.f32 %v1778, %v1808
        %v1816 = vmul.f32 %v1779, %v1808
        %v1817 = vmul.f32 %v1780, %v1808
        %v1818 = vmul.f32 %v1781, %v1808
        %v1819 = vmul.f32 %v1782, %v1808
        %v1820 = vmul.f32 %v1783, %v1808
        %v1821 = vmul.f32 %v1784, %v1808
        %v1822 = vmul.f32 %v1785, %v1808
        %v1823 = vmul.f32 %v1786, %v1808
        %v1824 = vmul.f32 %v1787, %v1808
        %v1825 = vmul.f32 %v1788, %v1808
        %v1826 = vmul.f32 %v1789, %v1808
        %v1827 = vmul.f32 %v1790, %v1808
        %v1828 = vmul.f32 %v1791, %v1808
        %v1829 = vmul.f32 %v1792, %v1808
        %v1830 = vmul.f32 %v1793, %v1808
        %v1831 = vmul.f32 %v1794, %v1808
        %v1832 = vmul.f32 %v1795, %v1808
        %v1833 = vmul.f32 %v1796, %v1808
        %v1834 = vmul.f32 %v1797, %v1808
        %v1835 = vmul.f32 %v1798, %v1808
        %v1836 = vmul.f32 %v1799, %v1808
        %v1837 = vmul.f32 %v1800, %v1808
        %v1838 = vmul.f32 %v1801, %v1808
        %v1839 = vmul.f32 %v1802, %v1808
        %v1840 = vmul.f32 %v1803, %v1808
        %v1841 = vmul.f32 %v1804, %v1808
        %v1842 = vadd.f32 %v1740, %v1810
        %v1843 = vadd.f32 %v1741, %v1811
        %v1844 = vadd.f32 %v1742, %v1812
        %v1845 = vadd.f32 %v1743, %v1813
        %v1846 = vadd.f32 %v1744, %v1814
        %v1847 = vadd.f32 %v1745, %v1815
        %v1848 = vadd.f32 %v1746, %v1816
        %v1849 = vadd.f32 %v1747, %v1817
        %v1850 = vadd.f32 %v1748, %v1818
        %v1851 = vadd.f32 %v1749, %v1819
        %v1852 = vadd.f32 %v1750, %v1820
        %v1853 = vadd.f32 %v1751, %v1821
        %v1854 = vadd.f32 %v1752, %v1822
        %v1855 = vadd.f32 %v1753, %v1823
        %v1856 = vadd.f32 %v1754, %v1824
        %v1857 = vadd.f32 %v1755, %v1825
        %v1858 = vadd.f32 %v1756, %v1826
        %v1859 = vadd.f32 %v1757, %v1827
        %v1860 = vadd.f32 %v1758, %v1828
        %v1861 = vadd.f32 %v1759, %v1829
        %v1862 = vadd.f32 %v1760, %v1830
        %v1863 = vadd.f32 %v1761, %v1831
        %v1864 = vadd.f32 %v1762, %v1832
        %v1865 = vadd.f32 %v1763, %v1833
        %v1866 = vadd.f32 %v1764, %v1834
        %v1867 = vadd.f32 %v1765, %v1835
        %v1868 = vadd.f32 %v1766, %v1836
        %v1869 = vadd.f32 %v1767, %v1837
        %v1870 = vadd.f32 %v1768, %v1838
        %v1871 = vadd.f32 %v1769, %v1839
        %v1872 = vadd.f32 %v1770, %v1840
        %v1873 = vadd.f32 %v1771, %v1841
        %v1874 = vld [vmem:[%s1772 + $0x1] sm:$0xff]
        %v1875 = vld [vmem:[%s1772 + $0x9] sm:$0xff]
        %v1876 = vld [vmem:[%s1772 + $0x19] sm:$0xff]
        %v1877 = vld [vmem:[%s1772 + $0x21] sm:$0xff]
        %v1878 = vld [vmem:[%s1772 + $0x31] sm:$0xff]
        %v1879 = vld [vmem:[%s1772 + $0x39] sm:$0xff]
        %v1880 = vld [vmem:[%s1772 + $0x49] sm:$0xff]
        %v1881 = vld [vmem:[%s1772 + $0x51] sm:$0xff]
        %v1882 = vld [vmem:[%s1772 + $0x61] sm:$0xff]
        %v1883 = vld [vmem:[%s1772 + $0x69] sm:$0xff]
        %v1884 = vld [vmem:[%s1772 + $0x79] sm:$0xff]
        %v1885 = vld [vmem:[%s1772 + $0x81] sm:$0xff]
        %v1886 = vld [vmem:[%s1772 + $0x91] sm:$0xff]
        %v1887 = vld [vmem:[%s1772 + $0x99] sm:$0xff]
        %v1888 = vld [vmem:[%s1772 + $0xa9] sm:$0xff]
        %v1889 = vld [vmem:[%s1772 + $0xb1] sm:$0xff]
        %v1890 = vld [vmem:[%s1772 + $0xc1] sm:$0xff]
        %v1891 = vld [vmem:[%s1772 + $0xc9] sm:$0xff]
        %v1892 = vld [vmem:[%s1772 + $0xd9] sm:$0xff]
        %v1893 = vld [vmem:[%s1772 + $0xe1] sm:$0xff]
        %v1894 = vld [vmem:[%s1772 + $0xf1] sm:$0xff]
        %v1895 = vld [vmem:[%s1772 + $0xf9] sm:$0xff]
        %v1896 = vld [vmem:[%s1772 + $0x109] sm:$0xff]
        %v1897 = vld [vmem:[%s1772 + $0x111] sm:$0xff]
        %v1898 = vld [vmem:[%s1772 + $0x121] sm:$0xff]
        %v1899 = vld [vmem:[%s1772 + $0x129] sm:$0xff]
        %v1900 = vld [vmem:[%s1772 + $0x139] sm:$0xff]
        %v1901 = vld [vmem:[%s1772 + $0x141] sm:$0xff]
        %v1902 = vld [vmem:[%s1772 + $0x151] sm:$0xff]
        %v1903 = vld [vmem:[%s1772 + $0x159] sm:$0xff]
        %v1904 = vld [vmem:[%s1772 + $0x169] sm:$0xff]
        %v1905 = vld [vmem:[%s1772 + $0x171] sm:$0xff]
        %s1906 = scalar_lea.vmem %s5, 7
        %v1907 = vld [vmem:[%s1906] sm:$0x1]
        %v1909 = vperm.slane %v1907, 0
        %v1911 = vmul.f32 %v1874, %v1909
        %v1912 = vmul.f32 %v1875, %v1909
        %v1913 = vmul.f32 %v1876, %v1909
        %v1914 = vmul.f32 %v1877, %v1909
        %v1915 = vmul.f32 %v1878, %v1909
        %v1916 = vmul.f32 %v1879, %v1909
        %v1917 = vmul.f32 %v1880, %v1909
        %v1918 = vmul.f32 %v1881, %v1909
        %v1919 = vmul.f32 %v1882, %v1909
        %v1920 = vmul.f32 %v1883, %v1909
        %v1921 = vmul.f32 %v1884, %v1909
        %v1922 = vmul.f32 %v1885, %v1909
        %v1923 = vmul.f32 %v1886, %v1909
        %v1924 = vmul.f32 %v1887, %v1909
        %v1925 = vmul.f32 %v1888, %v1909
        %v1926 = vmul.f32 %v1889, %v1909
        %v1927 = vmul.f32 %v1890, %v1909
        %v1928 = vmul.f32 %v1891, %v1909
        %v1929 = vmul.f32 %v1892, %v1909
        %v1930 = vmul.f32 %v1893, %v1909
        %v1931 = vmul.f32 %v1894, %v1909
        %v1932 = vmul.f32 %v1895, %v1909
        %v1933 = vmul.f32 %v1896, %v1909
        %v1934 = vmul.f32 %v1897, %v1909
        %v1935 = vmul.f32 %v1898, %v1909
        %v1936 = vmul.f32 %v1899, %v1909
        %v1937 = vmul.f32 %v1900, %v1909
        %v1938 = vmul.f32 %v1901, %v1909
        %v1939 = vmul.f32 %v1902, %v1909
        %v1940 = vmul.f32 %v1903, %v1909
        %v1941 = vmul.f32 %v1904, %v1909
        %v1942 = vmul.f32 %v1905, %v1909
        %v1943 = vadd.f32 %v1842, %v1911
        %v1944 = vadd.f32 %v1843, %v1912
        %v1945 = vadd.f32 %v1844, %v1913
        %v1946 = vadd.f32 %v1845, %v1914
        %v1947 = vadd.f32 %v1846, %v1915
        %v1948 = vadd.f32 %v1847, %v1916
        %v1949 = vadd.f32 %v1848, %v1917
        %v1950 = vadd.f32 %v1849, %v1918
        %v1951 = vadd.f32 %v1850, %v1919
        %v1952 = vadd.f32 %v1851, %v1920
        %v1953 = vadd.f32 %v1852, %v1921
        %v1954 = vadd.f32 %v1853, %v1922
        %v1955 = vadd.f32 %v1854, %v1923
        %v1956 = vadd.f32 %v1855, %v1924
        %v1957 = vadd.f32 %v1856, %v1925
        %v1958 = vadd.f32 %v1857, %v1926
        %v1959 = vadd.f32 %v1858, %v1927
        %v1960 = vadd.f32 %v1859, %v1928
        %v1961 = vadd.f32 %v1860, %v1929
        %v1962 = vadd.f32 %v1861, %v1930
        %v1963 = vadd.f32 %v1862, %v1931
        %v1964 = vadd.f32 %v1863, %v1932
        %v1965 = vadd.f32 %v1864, %v1933
        %v1966 = vadd.f32 %v1865, %v1934
        %v1967 = vadd.f32 %v1866, %v1935
        %v1968 = vadd.f32 %v1867, %v1936
        %v1969 = vadd.f32 %v1868, %v1937
        %v1970 = vadd.f32 %v1869, %v1938
        %v1971 = vadd.f32 %v1870, %v1939
        %v1972 = vadd.f32 %v1871, %v1940
        %v1973 = vadd.f32 %v1872, %v1941
        %v1974 = vadd.f32 %v1873, %v1942
        %v1975 = vld [vmem:[%s1772 + $0x2] sm:$0xff]
        %v1976 = vld [vmem:[%s1772 + $0xa] sm:$0xff]
        %v1977 = vld [vmem:[%s1772 + $0x1a] sm:$0xff]
        %v1978 = vld [vmem:[%s1772 + $0x22] sm:$0xff]
        %v1979 = vld [vmem:[%s1772 + $0x32] sm:$0xff]
        %v1980 = vld [vmem:[%s1772 + $0x3a] sm:$0xff]
        %v1981 = vld [vmem:[%s1772 + $0x4a] sm:$0xff]
        %v1982 = vld [vmem:[%s1772 + $0x52] sm:$0xff]
        %v1983 = vld [vmem:[%s1772 + $0x62] sm:$0xff]
        %v1984 = vld [vmem:[%s1772 + $0x6a] sm:$0xff]
        %v1985 = vld [vmem:[%s1772 + $0x7a] sm:$0xff]
        %v1986 = vld [vmem:[%s1772 + $0x82] sm:$0xff]
        %v1987 = vld [vmem:[%s1772 + $0x92] sm:$0xff]
        %v1988 = vld [vmem:[%s1772 + $0x9a] sm:$0xff]
        %v1989 = vld [vmem:[%s1772 + $0xaa] sm:$0xff]
        %v1990 = vld [vmem:[%s1772 + $0xb2] sm:$0xff]
        %v1991 = vld [vmem:[%s1772 + $0xc2] sm:$0xff]
        %v1992 = vld [vmem:[%s1772 + $0xca] sm:$0xff]
        %v1993 = vld [vmem:[%s1772 + $0xda] sm:$0xff]
        %v1994 = vld [vmem:[%s1772 + $0xe2] sm:$0xff]
        %v1995 = vld [vmem:[%s1772 + $0xf2] sm:$0xff]
        %v1996 = vld [vmem:[%s1772 + $0xfa] sm:$0xff]
        %v1997 = vld [vmem:[%s1772 + $0x10a] sm:$0xff]
        %v1998 = vld [vmem:[%s1772 + $0x112] sm:$0xff]
        %v1999 = vld [vmem:[%s1772 + $0x122] sm:$0xff]
        %v2000 = vld [vmem:[%s1772 + $0x12a] sm:$0xff]
        %v2001 = vld [vmem:[%s1772 + $0x13a] sm:$0xff]
        %v2002 = vld [vmem:[%s1772 + $0x142] sm:$0xff]
        %v2003 = vld [vmem:[%s1772 + $0x152] sm:$0xff]
        %v2004 = vld [vmem:[%s1772 + $0x15a] sm:$0xff]
        %v2005 = vld [vmem:[%s1772 + $0x16a] sm:$0xff]
        %v2006 = vld [vmem:[%s1772 + $0x172] sm:$0xff]
        %s2007 = scalar_lea.vmem %s5, 8
        %v2008 = vld [vmem:[%s2007] sm:$0x1]
        %v2010 = vperm.slane %v2008, 0
        %v2012 = vmul.f32 %v1975, %v2010
        %v2013 = vmul.f32 %v1976, %v2010
        %v2014 = vmul.f32 %v1977, %v2010
        %v2015 = vmul.f32 %v1978, %v2010
        %v2016 = vmul.f32 %v1979, %v2010
        %v2017 = vmul.f32 %v1980, %v2010
        %v2018 = vmul.f32 %v1981, %v2010
        %v2019 = vmul.f32 %v1982, %v2010
        %v2020 = vmul.f32 %v1983, %v2010
        %v2021 = vmul.f32 %v1984, %v2010
        %v2022 = vmul.f32 %v1985, %v2010
        %v2023 = vmul.f32 %v1986, %v2010
        %v2024 = vmul.f32 %v1987, %v2010
        %v2025 = vmul.f32 %v1988, %v2010
        %v2026 = vmul.f32 %v1989, %v2010
        %v2027 = vmul.f32 %v1990, %v2010
        %v2028 = vmul.f32 %v1991, %v2010
        %v2029 = vmul.f32 %v1992, %v2010
        %v2030 = vmul.f32 %v1993, %v2010
        %v2031 = vmul.f32 %v1994, %v2010
        %v2032 = vmul.f32 %v1995, %v2010
        %v2033 = vmul.f32 %v1996, %v2010
        %v2034 = vmul.f32 %v1997, %v2010
        %v2035 = vmul.f32 %v1998, %v2010
        %v2036 = vmul.f32 %v1999, %v2010
        %v2037 = vmul.f32 %v2000, %v2010
        %v2038 = vmul.f32 %v2001, %v2010
        %v2039 = vmul.f32 %v2002, %v2010
        %v2040 = vmul.f32 %v2003, %v2010
        %v2041 = vmul.f32 %v2004, %v2010
        %v2042 = vmul.f32 %v2005, %v2010
        %v2043 = vmul.f32 %v2006, %v2010
        %v2044 = vadd.f32 %v1943, %v2012
        %v2045 = vadd.f32 %v1944, %v2013
        %v2046 = vadd.f32 %v1945, %v2014
        %v2047 = vadd.f32 %v1946, %v2015
        %v2048 = vadd.f32 %v1947, %v2016
        %v2049 = vadd.f32 %v1948, %v2017
        %v2050 = vadd.f32 %v1949, %v2018
        %v2051 = vadd.f32 %v1950, %v2019
        %v2052 = vadd.f32 %v1951, %v2020
        %v2053 = vadd.f32 %v1952, %v2021
        %v2054 = vadd.f32 %v1953, %v2022
        %v2055 = vadd.f32 %v1954, %v2023
        %v2056 = vadd.f32 %v1955, %v2024
        %v2057 = vadd.f32 %v1956, %v2025
        %v2058 = vadd.f32 %v1957, %v2026
        %v2059 = vadd.f32 %v1958, %v2027
        %v2060 = vadd.f32 %v1959, %v2028
        %v2061 = vadd.f32 %v1960, %v2029
        %v2062 = vadd.f32 %v1961, %v2030
        %v2063 = vadd.f32 %v1962, %v2031
        %v2064 = vadd.f32 %v1963, %v2032
        %v2065 = vadd.f32 %v1964, %v2033
        %v2066 = vadd.f32 %v1965, %v2034
        %v2067 = vadd.f32 %v1966, %v2035
        %v2068 = vadd.f32 %v1967, %v2036
        %v2069 = vadd.f32 %v1968, %v2037
        %v2070 = vadd.f32 %v1969, %v2038
        %v2071 = vadd.f32 %v1970, %v2039
        %v2072 = vadd.f32 %v1971, %v2040
        %v2073 = vadd.f32 %v1972, %v2041
        %v2074 = vadd.f32 %v1973, %v2042
        %v2075 = vadd.f32 %v1974, %v2043
        %v2076 = vld [vmem:[%s6] sm:$0x1]
        %v2078 = vperm.slane %v2076, 0
        %v2080 = vadd.f32 %v2044, %v2078
        %v2081 = vadd.f32 %v2045, %v2078
        %v2082 = vadd.f32 %v2046, %v2078
        %v2083 = vadd.f32 %v2047, %v2078
        %v2084 = vadd.f32 %v2048, %v2078
        %v2085 = vadd.f32 %v2049, %v2078
        %v2086 = vadd.f32 %v2050, %v2078
        %v2087 = vadd.f32 %v2051, %v2078
        %v2088 = vadd.f32 %v2052, %v2078
        %v2089 = vadd.f32 %v2053, %v2078
        %v2090 = vadd.f32 %v2054, %v2078
        %v2091 = vadd.f32 %v2055, %v2078
        %v2092 = vadd.f32 %v2056, %v2078
        %v2093 = vadd.f32 %v2057, %v2078
        %v2094 = vadd.f32 %v2058, %v2078
        %v2095 = vadd.f32 %v2059, %v2078
        %v2096 = vadd.f32 %v2060, %v2078
        %v2097 = vadd.f32 %v2061, %v2078
        %v2098 = vadd.f32 %v2062, %v2078
        %v2099 = vadd.f32 %v2063, %v2078
        %v2100 = vadd.f32 %v2064, %v2078
        %v2101 = vadd.f32 %v2065, %v2078
        %v2102 = vadd.f32 %v2066, %v2078
        %v2103 = vadd.f32 %v2067, %v2078
        %v2104 = vadd.f32 %v2068, %v2078
        %v2105 = vadd.f32 %v2069, %v2078
        %v2106 = vadd.f32 %v2070, %v2078
        %v2107 = vadd.f32 %v2071, %v2078
        %v2108 = vadd.f32 %v2072, %v2078
        %v2109 = vadd.f32 %v2073, %v2078
        %v2110 = vadd.f32 %v2074, %v2078
        %v2111 = vadd.f32 %v2075, %v2078
        %v2112 = vrot.slane %v277, 4
        %v2113 = vrot.slane %v278, 4
        %v2114 = vrot.slane %v279, 4
        %v2115 = vrot.slane %v280, 4
        %v2116 = vrot.slane %v281, 4
        %v2117 = vrot.slane %v282, 4
        %v2118 = vrot.slane %v283, 4
        %v2119 = vrot.slane %v284, 4
        %v2120 = vrot.slane %v285, 4
        %v2121 = vrot.slane %v286, 4
        %v2122 = vrot.slane %v287, 4
        %v2123 = vrot.slane %v288, 4
        %v2124 = vrot.slane %v289, 4
        %v2125 = vrot.slane %v290, 4
        %v2126 = vrot.slane %v291, 4
        %v2127 = vrot.slane %v292, 4
        %v2128 = vrot.slane %v293, 4
        %v2129 = vrot.slane %v294, 4
        %v2130 = vrot.slane %v295, 4
        %v2131 = vrot.slane %v296, 4
        %v2132 = vrot.slane %v297, 4
        %v2133 = vrot.slane %v298, 4
        %v2134 = vrot.slane %v299, 4
        %v2135 = vrot.slane %v300, 4
        %v2136 = vrot.slane %v301, 4
        %v2137 = vrot.slane %v302, 4
        %v2138 = vrot.slane %v303, 4
        %v2139 = vrot.slane %v304, 4
        %v2140 = vrot.slane %v305, 4
        %v2141 = vrot.slane %v306, 4
        %v2142 = vrot.slane %v307, 4
        %v2143 = vrot.slane %v308, 4
        %v2176 = vunpack.c.l.bf16 %v2112
        %v2177 = vunpack.c.l.bf16 %v2113
        %v2178 = vunpack.c.l.bf16 %v2114
        %v2179 = vunpack.c.l.bf16 %v2115
        %v2180 = vunpack.c.l.bf16 %v2116
        %v2181 = vunpack.c.l.bf16 %v2117
        %v2182 = vunpack.c.l.bf16 %v2118
        %v2183 = vunpack.c.l.bf16 %v2119
        %v2184 = vunpack.c.l.bf16 %v2120
        %v2185 = vunpack.c.l.bf16 %v2121
        %v2186 = vunpack.c.l.bf16 %v2122
        %v2187 = vunpack.c.l.bf16 %v2123
        %v2188 = vunpack.c.l.bf16 %v2124
        %v2189 = vunpack.c.l.bf16 %v2125
        %v2190 = vunpack.c.l.bf16 %v2126
        %v2191 = vunpack.c.l.bf16 %v2127
        %v2192 = vunpack.c.l.bf16 %v2128
        %v2193 = vunpack.c.l.bf16 %v2129
        %v2194 = vunpack.c.l.bf16 %v2130
        %v2195 = vunpack.c.l.bf16 %v2131
        %v2196 = vunpack.c.l.bf16 %v2132
        %v2197 = vunpack.c.l.bf16 %v2133
        %v2198 = vunpack.c.l.bf16 %v2134
        %v2199 = vunpack.c.l.bf16 %v2135
        %v2200 = vunpack.c.l.bf16 %v2136
        %v2201 = vunpack.c.l.bf16 %v2137
        %v2202 = vunpack.c.l.bf16 %v2138
        %v2203 = vunpack.c.l.bf16 %v2139
        %v2204 = vunpack.c.l.bf16 %v2140
        %v2205 = vunpack.c.l.bf16 %v2141
        %v2206 = vunpack.c.l.bf16 %v2142
        %v2207 = vunpack.c.l.bf16 %v2143
        %v2208 = vadd.f32 %v2080, %v2176
        %v2209 = vadd.f32 %v2081, %v2177
        %v2210 = vadd.f32 %v2082, %v2178
        %v2211 = vadd.f32 %v2083, %v2179
        %v2212 = vadd.f32 %v2084, %v2180
        %v2213 = vadd.f32 %v2085, %v2181
        %v2214 = vadd.f32 %v2086, %v2182
        %v2215 = vadd.f32 %v2087, %v2183
        %v2216 = vadd.f32 %v2088, %v2184
        %v2217 = vadd.f32 %v2089, %v2185
        %v2218 = vadd.f32 %v2090, %v2186
        %v2219 = vadd.f32 %v2091, %v2187
        %v2220 = vadd.f32 %v2092, %v2188
        %v2221 = vadd.f32 %v2093, %v2189
        %v2222 = vadd.f32 %v2094, %v2190
        %v2223 = vadd.f32 %v2095, %v2191
        %v2224 = vadd.f32 %v2096, %v2192
        %v2225 = vadd.f32 %v2097, %v2193
        %v2226 = vadd.f32 %v2098, %v2194
        %v2227 = vadd.f32 %v2099, %v2195
        %v2228 = vadd.f32 %v2100, %v2196
        %v2229 = vadd.f32 %v2101, %v2197
        %v2230 = vadd.f32 %v2102, %v2198
        %v2231 = vadd.f32 %v2103, %v2199
        %v2232 = vadd.f32 %v2104, %v2200
        %v2233 = vadd.f32 %v2105, %v2201
        %v2234 = vadd.f32 %v2106, %v2202
        %v2235 = vadd.f32 %v2107, %v2203
        %v2236 = vadd.f32 %v2108, %v2204
        %v2237 = vadd.f32 %v2109, %v2205
        %v2238 = vadd.f32 %v2110, %v2206
        %v2239 = vadd.f32 %v2111, %v2207
        %v2240 = vmax.f32 %v2208, 0.0
        %v2241 = vmax.f32 %v2209, 0.0
        %v2242 = vmax.f32 %v2210, 0.0
        %v2243 = vmax.f32 %v2211, 0.0
        %v2244 = vmax.f32 %v2212, 0.0
        %v2245 = vmax.f32 %v2213, 0.0
        %v2246 = vmax.f32 %v2214, 0.0
        %v2247 = vmax.f32 %v2215, 0.0
        %v2248 = vmax.f32 %v2216, 0.0
        %v2249 = vmax.f32 %v2217, 0.0
        %v2250 = vmax.f32 %v2218, 0.0
        %v2251 = vmax.f32 %v2219, 0.0
        %v2252 = vmax.f32 %v2220, 0.0
        %v2253 = vmax.f32 %v2221, 0.0
        %v2254 = vmax.f32 %v2222, 0.0
        %v2255 = vmax.f32 %v2223, 0.0
        %v2256 = vmax.f32 %v2224, 0.0
        %v2257 = vmax.f32 %v2225, 0.0
        %v2258 = vmax.f32 %v2226, 0.0
        %v2259 = vmax.f32 %v2227, 0.0
        %v2260 = vmax.f32 %v2228, 0.0
        %v2261 = vmax.f32 %v2229, 0.0
        %v2262 = vmax.f32 %v2230, 0.0
        %v2263 = vmax.f32 %v2231, 0.0
        %v2264 = vmax.f32 %v2232, 0.0
        %v2265 = vmax.f32 %v2233, 0.0
        %v2266 = vmax.f32 %v2234, 0.0
        %v2267 = vmax.f32 %v2235, 0.0
        %v2268 = vmax.f32 %v2236, 0.0
        %v2269 = vmax.f32 %v2237, 0.0
        %v2270 = vmax.f32 %v2238, 0.0
        %v2271 = vmax.f32 %v2239, 0.0
        %2272 = vst [vmem:[%s271 + $0x8] sm:$0xff] %v2240
        %2273 = vst [vmem:[%s271 + $0x18] sm:$0xff] %v2241
        %2274 = vst [vmem:[%s271 + $0x28] sm:$0xff] %v2242
        %2275 = vst [vmem:[%s271 + $0x38] sm:$0xff] %v2243
        %2276 = vst [vmem:[%s271 + $0x48] sm:$0xff] %v2244
        %2277 = vst [vmem:[%s271 + $0x58] sm:$0xff] %v2245
        %2278 = vst [vmem:[%s271 + $0x68] sm:$0xff] %v2246
        %2279 = vst [vmem:[%s271 + $0x78] sm:$0xff] %v2247
        %2280 = vst [vmem:[%s271 + $0x88] sm:$0xff] %v2248
        %2281 = vst [vmem:[%s271 + $0x98] sm:$0xff] %v2249
        %2282 = vst [vmem:[%s271 + $0xa8] sm:$0xff] %v2250
        %2283 = vst [vmem:[%s271 + $0xb8] sm:$0xff] %v2251
        %2284 = vst [vmem:[%s271 + $0xc8] sm:$0xff] %v2252
        %2285 = vst [vmem:[%s271 + $0xd8] sm:$0xff] %v2253
        %2286 = vst [vmem:[%s271 + $0xe8] sm:$0xff] %v2254
        %2287 = vst [vmem:[%s271 + $0xf8] sm:$0xff] %v2255
        %2288 = vst [vmem:[%s271 + $0x108] sm:$0xff] %v2256
        %2289 = vst [vmem:[%s271 + $0x118] sm:$0xff] %v2257
        %2290 = vst [vmem:[%s271 + $0x128] sm:$0xff] %v2258
        %2291 = vst [vmem:[%s271 + $0x138] sm:$0xff] %v2259
        %2292 = vst [vmem:[%s271 + $0x148] sm:$0xff] %v2260
        %2293 = vst [vmem:[%s271 + $0x158] sm:$0xff] %v2261
        %2294 = vst [vmem:[%s271 + $0x168] sm:$0xff] %v2262
        %2295 = vst [vmem:[%s271 + $0x178] sm:$0xff] %v2263
        %2296 = vst [vmem:[%s271 + $0x188] sm:$0xff] %v2264
        %2297 = vst [vmem:[%s271 + $0x198] sm:$0xff] %v2265
        %2298 = vst [vmem:[%s271 + $0x1a8] sm:$0xff] %v2266
        %2299 = vst [vmem:[%s271 + $0x1b8] sm:$0xff] %v2267
        %2300 = vst [vmem:[%s271 + $0x1c8] sm:$0xff] %v2268
        %2301 = vst [vmem:[%s271 + $0x1d8] sm:$0xff] %v2269
        %2302 = vst [vmem:[%s271 + $0x1e8] sm:$0xff] %v2270
        %2303 = vst [vmem:[%s271 + $0x1f8] sm:$0xff] %v2271
        %s2304 = sand.u32 %s181, 1
        %s2305 = scalar_lea.sflag [#allocation4], %s2304
        %s2306 = sand.u32 %s181, 1
        %s2307 = smul.addr %s2306, 512
        %s2308 = scalar_lea.vmem [#allocation3], %s2307
        // Predicated region
        $region49: #{fire_module_forward.1} parent=47 // pred_check
          %p2309 = pneg %p191
        $region50: #{fire_module_forward.1} parent=47 // pred_check_branch
          %2311 = sbr.rel (%p2309) target = $region52
        $region51: #{fire_module_forward.1} parent=47 // pred_region
          %2313 = vsyncadd %s2305, 0
          %s2314 = smul.addr %s21, 64
          %s2315 = smul.addr %s2314, 8
          %s2316 = scalar_lea.hbm %s7, %s2315
          %s2317 = sshll.u32 %s2308, 4
          %s2318 = int_to_ptr.vmem [resolvable:$true] %s2317
          %s2319 = sshll.u32 %s2316, 4
          %s2320 = int_to_ptr.hbm [resolvable:$true] %s2319
          %2325 = dma.vmem_to_hbm [thread:$0]  %s2318, 8192, %s2320, %s2305, 256, 256, 16
        $region52: #{fire_module_forward.1} parent=47 // pred_fallthru
          _
      $region48: #{fire_module_forward.1} parent=5 // pred_fallthru
        _
      %p2326 = scmp.le.s32.totalorder 2, %s16
      // Predicated region
      $region53: #{fire_module_forward.1} parent=5 // pred_check
        %p2327 = pneg %p2326
      $region54: #{fire_module_forward.1} parent=5 // pred_check_branch
        %2329 = sbr.rel (%p2327) target = $region56
      $region55: #{fire_module_forward.1} parent=5 // pred_region
        %s2330 = ssub.s32 %s16, 2
        // Predicated region
        $region57: #{fire_module_forward.1} parent=55 // pred_check
          %p2331 = pneg %p197
        $region58: #{fire_module_forward.1} parent=55 // pred_check_branch
          %2333 = sbr.rel (%p2331) target = $region60
        $region59: #{fire_module_forward.1} parent=55 // pred_region
          %s2334 = sand.u32 %s182, 1
          %s2335 = scalar_lea.sflag [#allocation4], %s2334
          %s2336 = sand.u32 %s182, 1
          %s2337 = smul.addr %s2336, 512
          %s2338 = scalar_lea.vmem [#allocation3], %s2337
          %2340 = dma.done %s2335, 8192
        $region60: #{fire_module_forward.1} parent=55 // pred_fallthru
          _
      $region56: #{fire_module_forward.1} parent=5 // pred_fallthru
        _
    $region6: #{fire_module_forward.1} parent=1 // loop_footer
      %s20 = sadd.s32 1, %s16
    $region7: #{fire_module_forward.1} parent=1 // loop_footer_branch
      %15 = sbr.rel target = $region3
    $region8: #{fire_module_forward.1} parent=1 // loop_exit
      _
    %2341 = vsyncpa [#allocation4], 1
    %s2342 = scalar_lea.sflag [#allocation4], 1
    %2343 = vsyncpa %s2342, 1

</llo_original>
